<compile_context>
chip_gen: v6e
topology: v6e:2x2x1
jax: 0.10.0
libtpu: 0.0.40
codegen_flags: <defaults>
</compile_context>

<pallas_src>
import functools

import numpy as np
import jax
import jax.numpy as jnp
from jax.experimental import pallas as pl
from jax.experimental.pallas import tpu as pltpu


def _bdot(a, w):
    """bf16 operands onto the MXU, f32 accumulation."""
    return jnp.dot(a.astype(jnp.bfloat16), w, preferred_element_type=jnp.float32)


# ----------------------------------------------------------------------------
# Pallas kernel: stacked LSTM (last-step output) + fc1 -> ReLU -> fc2
# ----------------------------------------------------------------------------
def _lstm_fc_kernel(x_ref, w0_ref, b0_ref, whh0_ref, wih_ref, whh_ref, bd_ref,
                    w1_ref, b1_ref, w2_ref, b2_ref, out_ref, *,
                    num_layers, T, TB, H):
    G = 4 * H

    # ---- layer-0 input projection for the WHOLE sequence: one bf16 matmul ----
    x_all = x_ref[...].reshape(T * TB, H)          # TB multiple of 8 -> layout-free
    xp = _bdot(x_all, w0_ref[...]) + b0_ref[...]   # (T*TB, 4H) f32, bias folded

    # ---- hoist weight loads / bias broadcasts out of the serial time loop ----
    whh0 = whh0_ref[...]                                        # (H, 4H) bf16
    wihs = [wih_ref[l - 1] for l in range(1, num_layers)]       # (H, 4H) bf16
    whhs = [whh_ref[l - 1] for l in range(1, num_layers)]       # (H, 4H) bf16
    bds = [jnp.broadcast_to(bd_ref[l - 1], (TB, G))
           for l in range(1, num_layers)]                       # broadcast once

    h = [jnp.zeros((TB, H), jnp.float32) for _ in range(num_layers)]
    c = [jnp.zeros((TB, H), jnp.float32) for _ in range(num_layers)]

    def gate_update(gates, c_prev):
        # gate columns pre-reordered to [i | f | o | g]:
        #   one EUP pass (sigmoid via tanh identity) over 3H cols, one tanh over H
        sig = 0.5 * (jnp.tanh(0.5 * gates[:, :3 * H]) + 1.0)
        i_g = sig[:, 0 * H:1 * H]
        f_g = sig[:, 1 * H:2 * H]
        o_g = sig[:, 2 * H:3 * H]
        g_g = jnp.tanh(gates[:, 3 * H:])
        c_new = f_g * c_prev + i_g * g_g
        h_new = o_g * jnp.tanh(c_new)               # third (H-wide) EUP pass
        return h_new, c_new
        # TODO(synk): at H < 128 the sub-vreg gate slices still cost lane rotates
        # on the serial chain; roll c_prev/g into the gate lane blocks (or pad H
        # to 128) to get this down to one rotate per step.

    inp = h[0]
    # T is small & static: full unroll so the scheduler overlaps step tails/heads.
    for t in range(T):
        # layer 0: x-projection precomputed; only the recurrent matmul remains.
        gates0 = xp[t * TB:(t + 1) * TB, :] + _bdot(h[0], whh0)
        h[0], c[0] = gate_update(gates0, c[0])
        inp = h[0]
        for l in range(1, num_layers):
            # two small MXU pushes instead of a per-step lane concat (H < 128)
            gates = _bdot(inp, wihs[l - 1]) + _bdot(h[l], whhs[l - 1]) + bds[l - 1]
            h[l], c[l] = gate_update(gates, c[l])
            inp = h[l]

    # FC head: fc1 -> ReLU -> (dropout = identity in eval) -> fc2 (lane-padded)
    z1 = jnp.maximum(_bdot(inp, w1_ref[...]) + b1_ref[...], 0.0)
    out_ref[...] = _bdot(z1, w2_ref[...]) + b2_ref[...]          # (TB, OUT_PAD)


# ----------------------------------------------------------------------------
# Grid selection (generation-aware) + pallas_call wrapper
# ----------------------------------------------------------------------------
def _num_tensorcores():
    """v7x exposes 2 TensorCores per chip; v5e/v6e are single-TC."""
    try:
        kind = jax.devices()[0].device_kind.lower()
    except Exception:
        return 1
    return 2 if "7" in kind else 1


def _pick_block(nB, min_rows_per_core=128):
    """Split the independent nB axis across TCs only on multi-TC chips and only
    when the per-core block amortizes the per-grid-step overhead."""
    n_cores = _num_tensorcores()
    if (n_cores > 1 and nB >= n_cores * min_rows_per_core
            and nB % n_cores == 0 and (nB // n_cores) % 8 == 0):
        return nB // n_cores
    return nB


def lstm_fc_forward(x_tm, params, num_layers):
    """x_tm: (T, nB, H) time-major, n_dim zero-padded to H. Returns (nB, OUT_PAD)."""
    T, nB, H = x_tm.shape
    G = 4 * H
    FC = params['w1'].shape[1]
    OP = params['w2p'].shape[1]                 # lane-padded output width
    TB = _pick_block(nB)
    grid = (nB // TB,)

    kernel = functools.partial(_lstm_fc_kernel,
                               num_layers=num_layers, T=T, TB=TB, H=H)

    def whole(shape):
        zeros = (0,) * len(shape)
        return pl.BlockSpec(shape, lambda i: zeros)

    # TODO(synk): on v7x at production H add pipeline_mode=pl.Buffered(1) to the
    #             constant-index weight specs (single-buffer) for VMEM headroom.
    in_specs = [
        pl.BlockSpec((T, TB, H), lambda i: (0, i, 0)),            # x (per nB block)
        whole(params['w0'].shape), whole(params['b0'].shape),
        whole(params['whh0'].shape),
        whole(params['wih'].shape), whole(params['whh'].shape),
        whole(params['bd'].shape),
        whole(params['w1'].shape), whole(params['b1'].shape),
        whole(params['w2p'].shape), whole(params['b2p'].shape),
    ]
    out_specs = pl.BlockSpec((TB, OP), lambda i: (i, 0))

    L = num_layers
    flops = int(2 * T * nB * H * G            # layer-0 x-projection over all T
                + 2 * T * nB * H * G          # layer-0 recurrent matmul
                + 2 * T * (L - 1) * nB * 2 * H * G   # deeper layers (two dots)
                + 2 * nB * H * FC + 2 * nB * FC * OP)
    transcendentals = int(T * L * nB * 5 * H)        # 3H sig + H tanh + H tanh(c)
    weight_bytes = sum(int(np.prod(params[k].shape)) * params[k].dtype.itemsize
                       for k in ('w0', 'b0', 'whh0', 'wih', 'whh', 'bd',
                                 'w1', 'b1', 'w2p', 'b2p'))
    bytes_accessed = int(4 * x_tm.size + weight_bytes + 4 * nB * OP)

    if grid[0] > 1 and _num_tensorcores() > 1:
        dim_sem = (pltpu.CORE_PARALLEL,)      # engage both v7x TensorCores
    else:
        dim_sem = ("arbitrary",)              # single-TC: grid is a serial loop

    return pl.pallas_call(
        kernel,
        out_shape=jax.ShapeDtypeStruct((nB, OP), jnp.float32),
        grid=grid,
        in_specs=in_specs,
        out_specs=out_specs,
        compiler_params=pltpu.CompilerParams(dimension_semantics=dim_sem),
        cost_estimate=pl.CostEstimate(flops=flops,
                                      transcendentals=transcendentals,
                                      bytes_accessed=bytes_accessed),
    )(x_tm, params['w0'], params['b0'], params['whh0'], params['wih'],
      params['whh'], params['bd'], params['w1'], params['b1'],
      params['w2p'], params['b2p'])


# ----------------------------------------------------------------------------
# Pure-JAX reference (same weight layout, same bf16 dot quantization)
# ----------------------------------------------------------------------------
def lstm_fc_ref(x_tm, params, num_layers):
    T, nB, H = x_tm.shape
    h = [jnp.zeros((nB, H), jnp.float32) for _ in range(num_layers)]
    c = [jnp.zeros((nB, H), jnp.float32) for _ in range(num_layers)]

    def gate_update(gates, c_prev):        # columns [i | f | o | g]
        i = jax.nn.sigmoid(gates[:, 0 * H:1 * H])
        f = jax.nn.sigmoid(gates[:, 1 * H:2 * H])
        o = jax.nn.sigmoid(gates[:, 2 * H:3 * H])
        g = jnp.tanh(gates[:, 3 * H:])
        c_new = f * c_prev + i * g
        return o * jnp.tanh(c_new), c_new

    inp = h[0]
    for t in range(T):
        gates0 = _bdot(x_tm[t], params['w0']) + params['b0'] + _bdot(h[0], params['whh0'])
        h[0], c[0] = gate_update(gates0, c[0])
        inp = h[0]
        for l in range(1, num_layers):
            gates = (_bdot(inp, params['wih'][l - 1])
                     + _bdot(h[l], params['whh'][l - 1]) + params['bd'][l - 1])
            h[l], c[l] = gate_update(gates, c[l])
            inp = h[l]

    z1 = jnp.maximum(_bdot(inp, params['w1']) + params['b1'], 0.0)
    return _bdot(z1, params['w2p']) + params['b2p']


# ----------------------------------------------------------------------------
# Parameters (deterministic, PyTorch-style uniform init) + Lie generators (so(3))
# ----------------------------------------------------------------------------
def init_params(key, n_dim, hidden_dim, fc_dim, output_dim, num_layers):
    H = hidden_dim
    k = 1.0 / np.sqrt(H)
    keys = jax.random.split(key, 4 * num_layers + 4)
    ki = iter(keys)

    def reorder(w_t):
        # columns in PyTorch order [i | f | g | o]  ->  [i | f | o | g]
        i, f, g, o = (w_t[:, j * H:(j + 1) * H] for j in range(4))
        return jnp.concatenate([i, f, o, g], axis=1)

    w0 = b0 = whh0 = None
    wih_list, whh_list, bd_list = [], [], []
    for l in range(num_layers):
        in_dim = n_dim if l == 0 else H
        w_ih = jax.random.uniform(next(ki), (4 * H, in_dim), minval=-k, maxval=k)
        w_hh = jax.random.uniform(next(ki), (4 * H, H), minval=-k, maxval=k)
        b_ih = jax.random.uniform(next(ki), (4 * H,), minval=-k, maxval=k)
        b_hh = jax.random.uniform(next(ki), (4 * H,), minval=-k, maxval=k)
        b = reorder((b_ih + b_hh)[None, :]).astype(jnp.float32)     # fold biases
        whh_t = reorder(w_hh.T).astype(jnp.bfloat16)
        if l == 0:
            # layer-0 input weight: (H, 4H), rows beyond n_dim zero (x is padded)
            w0_f = jnp.zeros((H, 4 * H), jnp.float32).at[:in_dim, :].set(w_ih.T)
            w0 = reorder(w0_f).astype(jnp.bfloat16)
            b0, whh0 = b, whh_t
        else:
            wih_list.append(reorder(w_ih.T).astype(jnp.bfloat16))
            whh_list.append(whh_t)
            bd_list.append(b)

    if num_layers == 1:   # keep shapes well-formed; unused in the kernel
        wih_list.append(jnp.zeros((H, 4 * H), jnp.bfloat16))
        whh_list.append(jnp.zeros((H, 4 * H), jnp.bfloat16))
        bd_list.append(jnp.zeros((1, 4 * H), jnp.float32))

    k1 = 1.0 / np.sqrt(H)
    fc1_w = jax.random.uniform(next(ki), (fc_dim, H), minval=-k1, maxval=k1)
    fc1_b = jax.random.uniform(next(ki), (fc_dim,), minval=-k1, maxval=k1)
    k2 = 1.0 / np.sqrt(fc_dim)
    out_dim = output_dim * n_dim
    fc2_w = jax.random.uniform(next(ki), (out_dim, fc_dim), minval=-k2, maxval=k2)
    fc2_b = jax.random.uniform(next(ki), (out_dim,), minval=-k2, maxval=k2)

    # lane-dense output: pad fc2 to a multiple of 128 lanes
    OP = max(128, ((out_dim + 127) // 128) * 128)
    w2p = jnp.zeros((fc_dim, OP), jnp.float32).at[:, :out_dim].set(fc2_w.T)
    b2p = jnp.zeros((1, OP), jnp.float32).at[:, :out_dim].set(fc2_b)

    return dict(
        w0=w0, b0=b0, whh0=whh0,
        wih=jnp.stack(wih_list), whh=jnp.stack(whh_list), bd=jnp.stack(bd_list),
        w1=fc1_w.T.astype(jnp.bfloat16), b1=fc1_b[None, :].astype(jnp.float32),
        w2p=w2p.astype(jnp.bfloat16), b2p=b2p.astype(jnp.float32),
    )


def so3_generators():
    L1 = jnp.array([[0., 0., 0.], [0., 0., -1.], [0., 1., 0.]])
    L2 = jnp.array([[0., 0., 1.], [0., 0., 0.], [-1., 0., 0.]])
    L3 = jnp.array([[0., -1., 0.], [1., 0., 0.], [0., 0., 0.]])
    return jnp.stack([L1, L2, L3])                      # (3, 3, 3)


# ----------------------------------------------------------------------------
# Full forward: eval path with aug_eval=True, n_copy copies, averaged.
# ----------------------------------------------------------------------------
def aug_lstm_forward(x, params, Li, key, *, n_copy, hidden_dim, output_dim, n_dim,
                     num_layers, use_kernel=True):
    B, T, D = x.shape
    nB = n_copy * B
    # sampleFromLieGroup: z ~ N(0, sigma), g = expm(sum_c z_c * L_c), g_inv = expm(-..)
    sigma = 0.5
    z = sigma * jax.random.normal(key, (nB, Li.shape[0]), dtype=jnp.float32)
    A = jnp.einsum('bc,cjk->bjk', z, Li)
    g = jax.vmap(jax.scipy.linalg.expm)(A)               # (nB, D, D)
    g_inv = jax.vmap(jax.scipy.linalg.expm)(-A)

    x_rep = jnp.tile(x, (n_copy, 1, 1))                  # (nB, T, D)
    # fused "transform + time-major + pad": einsum straight into (T, nB, D) then
    # pad n_dim -> hidden_dim (no separate transpose pass before the kernel)
    x_aug_tm = jnp.einsum('bjk,btk->tbj', g, x_rep)      # (T, nB, D)
    x_tm = jnp.zeros((T, nB, hidden_dim), jnp.float32).at[:, :, :D].set(x_aug_tm)

    if use_kernel:
        out_pad = lstm_fc_forward(x_tm, params, num_layers)
    else:
        out_pad = lstm_fc_ref(x_tm, params, num_layers)
    out = out_pad[:, :output_dim * n_dim].reshape(nB, output_dim, n_dim)

    y_aug = jnp.einsum('bjk,btk->btj', g_inv, out)       # inverse transform
    y = y_aug.reshape(n_copy, B, output_dim, n_dim).mean(axis=0)
    return y


if __name__ == "__main__":
    # small shapes consistent with the module
    B, T = 2, 8
    n_dim, hidden_dim, fc_dim, output_dim, num_layers, n_copy = 3, 32, 64, 5, 2, 4

    root = jax.random.PRNGKey(0)
    k_x, k_p, k_z = jax.random.split(root, 3)
    x = jax.random.normal(k_x, (B, T, n_dim), dtype=jnp.float32)
    params = init_params(k_p, n_dim, hidden_dim, fc_dim, output_dim, num_layers)
    Li = so3_generators()

    y_kernel = aug_lstm_forward(x, params, Li, k_z, n_copy=n_copy,
                                hidden_dim=hidden_dim, output_dim=output_dim,
                                n_dim=n_dim, num_layers=num_layers, use_kernel=True)
    y_kernel = jax.block_until_ready(y_kernel)

    y_ref = aug_lstm_forward(x, params, Li, k_z, n_copy=n_copy,
                             hidden_dim=hidden_dim, output_dim=output_dim,
                             n_dim=n_dim, num_layers=num_layers, use_kernel=False)
    y_ref = jax.block_until_ready(y_ref)

    assert y_kernel.shape == (B, output_dim, n_dim)
    np.testing.assert_allclose(np.asarray(y_kernel), np.asarray(y_ref),
                               rtol=2e-3, atol=2e-3)
    print("KERNEL_OK")
</pallas_src>

<mosaic_0001>
module attributes {stable_mosaic.version = 11 : i64} {
  func.func @_lstm_fc_kernel(%arg0: i32, %arg1: memref<8x8x32xf32, #tpu.memory_space<vmem>>, %arg2: memref<32x128xbf16, #tpu.memory_space<vmem>>, %arg3: memref<1x128xf32, #tpu.memory_space<vmem>>, %arg4: memref<32x128xbf16, #tpu.memory_space<vmem>>, %arg5: memref<1x32x128xbf16, #tpu.memory_space<vmem>>, %arg6: memref<1x32x128xbf16, #tpu.memory_space<vmem>>, %arg7: memref<1x1x128xf32, #tpu.memory_space<vmem>>, %arg8: memref<32x64xbf16, #tpu.memory_space<vmem>>, %arg9: memref<1x64xf32, #tpu.memory_space<vmem>>, %arg10: memref<64x128xbf16, #tpu.memory_space<vmem>>, %arg11: memref<1x128xf32, #tpu.memory_space<vmem>>, %arg12: memref<8x128xf32, #tpu.memory_space<vmem>>) attributes {dimension_semantics = [#tpu.dimension_semantics<arbitrary>], iteration_bounds = array<i64: 1>, scalar_prefetch = 0 : i64, scratch_operands = 0 : i64, tpu.core_type = #tpu.core_type<tc>, window_params = [{transform_indices = @transform_0, window_bounds = array<i64: 8, 8, 32>}, {pipeline_mode = #tpu.pipeline_mode<synchronous>, transform_indices = @transform_1, window_bounds = array<i64: 32, 128>}, {pipeline_mode = #tpu.pipeline_mode<synchronous>, transform_indices = @transform_2, window_bounds = array<i64: 1, 128>}, {pipeline_mode = #tpu.pipeline_mode<synchronous>, transform_indices = @transform_3, window_bounds = array<i64: 32, 128>}, {pipeline_mode = #tpu.pipeline_mode<synchronous>, transform_indices = @transform_4, window_bounds = array<i64: 1, 32, 128>}, {pipeline_mode = #tpu.pipeline_mode<synchronous>, transform_indices = @transform_5, window_bounds = array<i64: 1, 32, 128>}, {pipeline_mode = #tpu.pipeline_mode<synchronous>, transform_indices = @transform_6, window_bounds = array<i64: 1, 1, 128>}, {pipeline_mode = #tpu.pipeline_mode<synchronous>, transform_indices = @transform_7, window_bounds = array<i64: 32, 64>}, {pipeline_mode = #tpu.pipeline_mode<synchronous>, transform_indices = @transform_8, window_bounds = array<i64: 1, 64>}, {pipeline_mode = #tpu.pipeline_mode<synchronous>, transform_indices = @transform_9, window_bounds = array<i64: 64, 128>}, {pipeline_mode = #tpu.pipeline_mode<synchronous>, transform_indices = @transform_10, window_bounds = array<i64: 1, 128>}, {transform_indices = @transform_11, window_bounds = array<i64: 8, 128>}]} {
    %c0 = arith.constant 0 : index
    %c0_0 = arith.constant 0 : index
    %c0_1 = arith.constant 0 : index
    %0 = vector.load %arg1[%c0, %c0_0, %c0_1] : memref<8x8x32xf32, #tpu.memory_space<vmem>>, vector<8x8x32xf32>
    %1 = vector.shape_cast %0 : vector<8x8x32xf32> to vector<64x32xf32>
    %c0_2 = arith.constant 0 : index
    %c0_3 = arith.constant 0 : index
    %2 = vector.load %arg2[%c0_2, %c0_3] : memref<32x128xbf16, #tpu.memory_space<vmem>>, vector<32x128xbf16>
    %3 = arith.truncf %1 : vector<64x32xf32> to vector<64x32xbf16>
    %cst = arith.constant dense<0.000000e+00> : vector<64x128xf32>
    %4 = tpu.matmul %3, %2, %cst {dimension_numbers = #tpu.dot_dimension_numbers<[1], [0], [0], [1], [0, 0, 1, 1], [], []>} : vector<64x32xbf16>, vector<32x128xbf16>, vector<64x128xf32> -> vector<64x128xf32>
    %c0_4 = arith.constant 0 : index
    %c0_5 = arith.constant 0 : index
    %5 = vector.load %arg3[%c0_4, %c0_5] : memref<1x128xf32, #tpu.memory_space<vmem>>, vector<1x128xf32>
    %6 = vector.broadcast %5 : vector<1x128xf32> to vector<64x128xf32>
    %7 = arith.addf %4, %6 : vector<64x128xf32>
    %c0_6 = arith.constant 0 : index
    %c0_7 = arith.constant 0 : index
    %8 = vector.load %arg4[%c0_6, %c0_7] : memref<32x128xbf16, #tpu.memory_space<vmem>>, vector<32x128xbf16>
    %c0_8 = arith.constant 0 : index
    %c0_9 = arith.constant 0 : index
    %c0_10 = arith.constant 0 : index
    %9 = vector.load %arg5[%c0_8, %c0_9, %c0_10] : memref<1x32x128xbf16, #tpu.memory_space<vmem>>, vector<1x32x128xbf16>
    %10 = vector.shape_cast %9 : vector<1x32x128xbf16> to vector<32x128xbf16>
    %c0_11 = arith.constant 0 : index
    %c0_12 = arith.constant 0 : index
    %c0_13 = arith.constant 0 : index
    %11 = vector.load %arg6[%c0_11, %c0_12, %c0_13] : memref<1x32x128xbf16, #tpu.memory_space<vmem>>, vector<1x32x128xbf16>
    %12 = vector.shape_cast %11 : vector<1x32x128xbf16> to vector<32x128xbf16>
    %c0_14 = arith.constant 0 : index
    %c0_15 = arith.constant 0 : index
    %c0_16 = arith.constant 0 : index
    %13 = vector.load %arg7[%c0_14, %c0_15, %c0_16] : memref<1x1x128xf32, #tpu.memory_space<vmem>>, vector<1x1x128xf32>
    %14 = vector.shape_cast %13 : vector<1x1x128xf32> to vector<1x128xf32>
    %15 = vector.shape_cast %14 : vector<1x128xf32> to vector<1x128xf32>
    %16 = vector.broadcast %15 : vector<1x128xf32> to vector<8x128xf32>
    %cst_17 = arith.constant 0.000000e+00 : f32
    %17 = vector.broadcast %cst_17 : f32 to vector<8x32xf32>
    %cst_18 = arith.constant 0.000000e+00 : f32
    %18 = vector.broadcast %cst_18 : f32 to vector<8x32xf32>
    %cst_19 = arith.constant 0.000000e+00 : f32
    %19 = vector.broadcast %cst_19 : f32 to vector<8x32xf32>
    %cst_20 = arith.constant 0.000000e+00 : f32
    %20 = vector.broadcast %cst_20 : f32 to vector<8x32xf32>
    %21 = vector.extract_strided_slice %7 {offsets = [0, 0], sizes = [8, 128], strides = [1, 1]} : vector<64x128xf32> to vector<8x128xf32>
    %22 = arith.truncf %17 : vector<8x32xf32> to vector<8x32xbf16>
    %cst_21 = arith.constant dense<0.000000e+00> : vector<8x128xf32>
    %23 = tpu.matmul %22, %8, %cst_21 {dimension_numbers = #tpu.dot_dimension_numbers<[1], [0], [0], [1], [0, 0, 1, 1], [], []>} : vector<8x32xbf16>, vector<32x128xbf16>, vector<8x128xf32> -> vector<8x128xf32>
    %24 = arith.addf %21, %23 : vector<8x128xf32>
    %25 = vector.extract_strided_slice %24 {offsets = [0, 0], sizes = [8, 96], strides = [1, 1]} : vector<8x128xf32> to vector<8x96xf32>
    %cst_22 = arith.constant 5.000000e-01 : f32
    %26 = vector.broadcast %cst_22 : f32 to vector<8x96xf32>
    %27 = arith.mulf %26, %25 : vector<8x96xf32>
    %28 = math.tanh %27 : vector<8x96xf32>
    %cst_23 = arith.constant 1.000000e+00 : f32
    %29 = vector.broadcast %cst_23 : f32 to vector<8x96xf32>
    %30 = arith.addf %28, %29 : vector<8x96xf32>
    %cst_24 = arith.constant 5.000000e-01 : f32
    %31 = vector.broadcast %cst_24 : f32 to vector<8x96xf32>
    %32 = arith.mulf %31, %30 : vector<8x96xf32>
    %33 = vector.extract_strided_slice %32 {offsets = [0, 0], sizes = [8, 32], strides = [1, 1]} : vector<8x96xf32> to vector<8x32xf32>
    %34 = vector.extract_strided_slice %32 {offsets = [0, 32], sizes = [8, 32], strides = [1, 1]} : vector<8x96xf32> to vector<8x32xf32>
    %35 = vector.extract_strided_slice %32 {offsets = [0, 64], sizes = [8, 32], strides = [1, 1]} : vector<8x96xf32> to vector<8x32xf32>
    %36 = vector.extract_strided_slice %24 {offsets = [0, 96], sizes = [8, 32], strides = [1, 1]} : vector<8x128xf32> to vector<8x32xf32>
    %37 = math.tanh %36 : vector<8x32xf32>
    %38 = arith.mulf %34, %19 : vector<8x32xf32>
    %39 = arith.mulf %33, %37 : vector<8x32xf32>
    %40 = arith.addf %38, %39 : vector<8x32xf32>
    %41 = math.tanh %40 : vector<8x32xf32>
    %42 = arith.mulf %35, %41 : vector<8x32xf32>
    %43 = arith.truncf %42 : vector<8x32xf32> to vector<8x32xbf16>
    %cst_25 = arith.constant dense<0.000000e+00> : vector<8x128xf32>
    %44 = tpu.matmul %43, %10, %cst_25 {dimension_numbers = #tpu.dot_dimension_numbers<[1], [0], [0], [1], [0, 0, 1, 1], [], []>} : vector<8x32xbf16>, vector<32x128xbf16>, vector<8x128xf32> -> vector<8x128xf32>
    %45 = arith.truncf %18 : vector<8x32xf32> to vector<8x32xbf16>
    %cst_26 = arith.constant dense<0.000000e+00> : vector<8x128xf32>
    %46 = tpu.matmul %45, %12, %cst_26 {dimension_numbers = #tpu.dot_dimension_numbers<[1], [0], [0], [1], [0, 0, 1, 1], [], []>} : vector<8x32xbf16>, vector<32x128xbf16>, vector<8x128xf32> -> vector<8x128xf32>
    %47 = arith.addf %44, %46 : vector<8x128xf32>
    %48 = arith.addf %47, %16 : vector<8x128xf32>
    %49 = vector.extract_strided_slice %48 {offsets = [0, 0], sizes = [8, 96], strides = [1, 1]} : vector<8x128xf32> to vector<8x96xf32>
    %cst_27 = arith.constant 5.000000e-01 : f32
    %50 = vector.broadcast %cst_27 : f32 to vector<8x96xf32>
    %51 = arith.mulf %50, %49 : vector<8x96xf32>
    %52 = math.tanh %51 : vector<8x96xf32>
    %cst_28 = arith.constant 1.000000e+00 : f32
    %53 = vector.broadcast %cst_28 : f32 to vector<8x96xf32>
    %54 = arith.addf %52, %53 : vector<8x96xf32>
    %cst_29 = arith.constant 5.000000e-01 : f32
    %55 = vector.broadcast %cst_29 : f32 to vector<8x96xf32>
    %56 = arith.mulf %55, %54 : vector<8x96xf32>
    %57 = vector.extract_strided_slice %56 {offsets = [0, 0], sizes = [8, 32], strides = [1, 1]} : vector<8x96xf32> to vector<8x32xf32>
    %58 = vector.extract_strided_slice %56 {offsets = [0, 32], sizes = [8, 32], strides = [1, 1]} : vector<8x96xf32> to vector<8x32xf32>
    %59 = vector.extract_strided_slice %56 {offsets = [0, 64], sizes = [8, 32], strides = [1, 1]} : vector<8x96xf32> to vector<8x32xf32>
    %60 = vector.extract_strided_slice %48 {offsets = [0, 96], sizes = [8, 32], strides = [1, 1]} : vector<8x128xf32> to vector<8x32xf32>
    %61 = math.tanh %60 : vector<8x32xf32>
    %62 = arith.mulf %58, %20 : vector<8x32xf32>
    %63 = arith.mulf %57, %61 : vector<8x32xf32>
    %64 = arith.addf %62, %63 : vector<8x32xf32>
    %65 = math.tanh %64 : vector<8x32xf32>
    %66 = arith.mulf %59, %65 : vector<8x32xf32>
    %67 = vector.extract_strided_slice %7 {offsets = [8, 0], sizes = [8, 128], strides = [1, 1]} : vector<64x128xf32> to vector<8x128xf32>
    %68 = arith.truncf %42 : vector<8x32xf32> to vector<8x32xbf16>
    %cst_30 = arith.constant dense<0.000000e+00> : vector<8x128xf32>
    %69 = tpu.matmul %68, %8, %cst_30 {dimension_numbers = #tpu.dot_dimension_numbers<[1], [0], [0], [1], [0, 0, 1, 1], [], []>} : vector<8x32xbf16>, vector<32x128xbf16>, vector<8x128xf32> -> vector<8x128xf32>
    %70 = arith.addf %67, %69 : vector<8x128xf32>
    %71 = vector.extract_strided_slice %70 {offsets = [0, 0], sizes = [8, 96], strides = [1, 1]} : vector<8x128xf32> to vector<8x96xf32>
    %cst_31 = arith.constant 5.000000e-01 : f32
    %72 = vector.broadcast %cst_31 : f32 to vector<8x96xf32>
    %73 = arith.mulf %72, %71 : vector<8x96xf32>
    %74 = math.tanh %73 : vector<8x96xf32>
    %cst_32 = arith.constant 1.000000e+00 : f32
    %75 = vector.broadcast %cst_32 : f32 to vector<8x96xf32>
    %76 = arith.addf %74, %75 : vector<8x96xf32>
    %cst_33 = arith.constant 5.000000e-01 : f32
    %77 = vector.broadcast %cst_33 : f32 to vector<8x96xf32>
    %78 = arith.mulf %77, %76 : vector<8x96xf32>
    %79 = vector.extract_strided_slice %78 {offsets = [0, 0], sizes = [8, 32], strides = [1, 1]} : vector<8x96xf32> to vector<8x32xf32>
    %80 = vector.extract_strided_slice %78 {offsets = [0, 32], sizes = [8, 32], strides = [1, 1]} : vector<8x96xf32> to vector<8x32xf32>
    %81 = vector.extract_strided_slice %78 {offsets = [0, 64], sizes = [8, 32], strides = [1, 1]} : vector<8x96xf32> to vector<8x32xf32>
    %82 = vector.extract_strided_slice %70 {offsets = [0, 96], sizes = [8, 32], strides = [1, 1]} : vector<8x128xf32> to vector<8x32xf32>
    %83 = math.tanh %82 : vector<8x32xf32>
    %84 = arith.mulf %80, %40 : vector<8x32xf32>
    %85 = arith.mulf %79, %83 : vector<8x32xf32>
    %86 = arith.addf %84, %85 : vector<8x32xf32>
    %87 = math.tanh %86 : vector<8x32xf32>
    %88 = arith.mulf %81, %87 : vector<8x32xf32>
    %89 = arith.truncf %88 : vector<8x32xf32> to vector<8x32xbf16>
    %cst_34 = arith.constant dense<0.000000e+00> : vector<8x128xf32>
    %90 = tpu.matmul %89, %10, %cst_34 {dimension_numbers = #tpu.dot_dimension_numbers<[1], [0], [0], [1], [0, 0, 1, 1], [], []>} : vector<8x32xbf16>, vector<32x128xbf16>, vector<8x128xf32> -> vector<8x128xf32>
    %91 = arith.truncf %66 : vector<8x32xf32> to vector<8x32xbf16>
    %cst_35 = arith.constant dense<0.000000e+00> : vector<8x128xf32>
    %92 = tpu.matmul %91, %12, %cst_35 {dimension_numbers = #tpu.dot_dimension_numbers<[1], [0], [0], [1], [0, 0, 1, 1], [], []>} : vector<8x32xbf16>, vector<32x128xbf16>, vector<8x128xf32> -> vector<8x128xf32>
    %93 = arith.addf %90, %92 : vector<8x128xf32>
    %94 = arith.addf %93, %16 : vector<8x128xf32>
    %95 = vector.extract_strided_slice %94 {offsets = [0, 0], sizes = [8, 96], strides = [1, 1]} : vector<8x128xf32> to vector<8x96xf32>
    %cst_36 = arith.constant 5.000000e-01 : f32
    %96 = vector.broadcast %cst_36 : f32 to vector<8x96xf32>
    %97 = arith.mulf %96, %95 : vector<8x96xf32>
    %98 = math.tanh %97 : vector<8x96xf32>
    %cst_37 = arith.constant 1.000000e+00 : f32
    %99 = vector.broadcast %cst_37 : f32 to vector<8x96xf32>
    %100 = arith.addf %98, %99 : vector<8x96xf32>
    %cst_38 = arith.constant 5.000000e-01 : f32
    %101 = vector.broadcast %cst_38 : f32 to vector<8x96xf32>
    %102 = arith.mulf %101, %100 : vector<8x96xf32>
    %103 = vector.extract_strided_slice %102 {offsets = [0, 0], sizes = [8, 32], strides = [1, 1]} : vector<8x96xf32> to vector<8x32xf32>
    %104 = vector.extract_strided_slice %102 {offsets = [0, 32], sizes = [8, 32], strides = [1, 1]} : vector<8x96xf32> to vector<8x32xf32>
    %105 = vector.extract_strided_slice %102 {offsets = [0, 64], sizes = [8, 32], strides = [1, 1]} : vector<8x96xf32> to vector<8x32xf32>
    %106 = vector.extract_strided_slice %94 {offsets = [0, 96], sizes = [8, 32], strides = [1, 1]} : vector<8x128xf32> to vector<8x32xf32>
    %107 = math.tanh %106 : vector<8x32xf32>
    %108 = arith.mulf %104, %64 : vector<8x32xf32>
    %109 = arith.mulf %103, %107 : vector<8x32xf32>
    %110 = arith.addf %108, %109 : vector<8x32xf32>
    %111 = math.tanh %110 : vector<8x32xf32>
    %112 = arith.mulf %105, %111 : vector<8x32xf32>
    %113 = vector.extract_strided_slice %7 {offsets = [16, 0], sizes = [8, 128], strides = [1, 1]} : vector<64x128xf32> to vector<8x128xf32>
    %114 = arith.truncf %88 : vector<8x32xf32> to vector<8x32xbf16>
    %cst_39 = arith.constant dense<0.000000e+00> : vector<8x128xf32>
    %115 = tpu.matmul %114, %8, %cst_39 {dimension_numbers = #tpu.dot_dimension_numbers<[1], [0], [0], [1], [0, 0, 1, 1], [], []>} : vector<8x32xbf16>, vector<32x128xbf16>, vector<8x128xf32> -> vector<8x128xf32>
    %116 = arith.addf %113, %115 : vector<8x128xf32>
    %117 = vector.extract_strided_slice %116 {offsets = [0, 0], sizes = [8, 96], strides = [1, 1]} : vector<8x128xf32> to vector<8x96xf32>
    %cst_40 = arith.constant 5.000000e-01 : f32
    %118 = vector.broadcast %cst_40 : f32 to vector<8x96xf32>
    %119 = arith.mulf %118, %117 : vector<8x96xf32>
    %120 = math.tanh %119 : vector<8x96xf32>
    %cst_41 = arith.constant 1.000000e+00 : f32
    %121 = vector.broadcast %cst_41 : f32 to vector<8x96xf32>
    %122 = arith.addf %120, %121 : vector<8x96xf32>
    %cst_42 = arith.constant 5.000000e-01 : f32
    %123 = vector.broadcast %cst_42 : f32 to vector<8x96xf32>
    %124 = arith.mulf %123, %122 : vector<8x96xf32>
    %125 = vector.extract_strided_slice %124 {offsets = [0, 0], sizes = [8, 32], strides = [1, 1]} : vector<8x96xf32> to vector<8x32xf32>
    %126 = vector.extract_strided_slice %124 {offsets = [0, 32], sizes = [8, 32], strides = [1, 1]} : vector<8x96xf32> to vector<8x32xf32>
    %127 = vector.extract_strided_slice %124 {offsets = [0, 64], sizes = [8, 32], strides = [1, 1]} : vector<8x96xf32> to vector<8x32xf32>
    %128 = vector.extract_strided_slice %116 {offsets = [0, 96], sizes = [8, 32], strides = [1, 1]} : vector<8x128xf32> to vector<8x32xf32>
    %129 = math.tanh %128 : vector<8x32xf32>
    %130 = arith.mulf %126, %86 : vector<8x32xf32>
    %131 = arith.mulf %125, %129 : vector<8x32xf32>
    %132 = arith.addf %130, %131 : vector<8x32xf32>
    %133 = math.tanh %132 : vector<8x32xf32>
    %134 = arith.mulf %127, %133 : vector<8x32xf32>
    %135 = arith.truncf %134 : vector<8x32xf32> to vector<8x32xbf16>
    %cst_43 = arith.constant dense<0.000000e+00> : vector<8x128xf32>
    %136 = tpu.matmul %135, %10, %cst_43 {dimension_numbers = #tpu.dot_dimension_numbers<[1], [0], [0], [1], [0, 0, 1, 1], [], []>} : vector<8x32xbf16>, vector<32x128xbf16>, vector<8x128xf32> -> vector<8x128xf32>
    %137 = arith.truncf %112 : vector<8x32xf32> to vector<8x32xbf16>
    %cst_44 = arith.constant dense<0.000000e+00> : vector<8x128xf32>
    %138 = tpu.matmul %137, %12, %cst_44 {dimension_numbers = #tpu.dot_dimension_numbers<[1], [0], [0], [1], [0, 0, 1, 1], [], []>} : vector<8x32xbf16>, vector<32x128xbf16>, vector<8x128xf32> -> vector<8x128xf32>
    %139 = arith.addf %136, %138 : vector<8x128xf32>
    %140 = arith.addf %139, %16 : vector<8x128xf32>
    %141 = vector.extract_strided_slice %140 {offsets = [0, 0], sizes = [8, 96], strides = [1, 1]} : vector<8x128xf32> to vector<8x96xf32>
    %cst_45 = arith.constant 5.000000e-01 : f32
    %142 = vector.broadcast %cst_45 : f32 to vector<8x96xf32>
    %143 = arith.mulf %142, %141 : vector<8x96xf32>
    %144 = math.tanh %143 : vector<8x96xf32>
    %cst_46 = arith.constant 1.000000e+00 : f32
    %145 = vector.broadcast %cst_46 : f32 to vector<8x96xf32>
    %146 = arith.addf %144, %145 : vector<8x96xf32>
    %cst_47 = arith.constant 5.000000e-01 : f32
    %147 = vector.broadcast %cst_47 : f32 to vector<8x96xf32>
    %148 = arith.mulf %147, %146 : vector<8x96xf32>
    %149 = vector.extract_strided_slice %148 {offsets = [0, 0], sizes = [8, 32], strides = [1, 1]} : vector<8x96xf32> to vector<8x32xf32>
    %150 = vector.extract_strided_slice %148 {offsets = [0, 32], sizes = [8, 32], strides = [1, 1]} : vector<8x96xf32> to vector<8x32xf32>
    %151 = vector.extract_strided_slice %148 {offsets = [0, 64], sizes = [8, 32], strides = [1, 1]} : vector<8x96xf32> to vector<8x32xf32>
    %152 = vector.extract_strided_slice %140 {offsets = [0, 96], sizes = [8, 32], strides = [1, 1]} : vector<8x128xf32> to vector<8x32xf32>
    %153 = math.tanh %152 : vector<8x32xf32>
    %154 = arith.mulf %150, %110 : vector<8x32xf32>
    %155 = arith.mulf %149, %153 : vector<8x32xf32>
    %156 = arith.addf %154, %155 : vector<8x32xf32>
    %157 = math.tanh %156 : vector<8x32xf32>
    %158 = arith.mulf %151, %157 : vector<8x32xf32>
    %159 = vector.extract_strided_slice %7 {offsets = [24, 0], sizes = [8, 128], strides = [1, 1]} : vector<64x128xf32> to vector<8x128xf32>
    %160 = arith.truncf %134 : vector<8x32xf32> to vector<8x32xbf16>
    %cst_48 = arith.constant dense<0.000000e+00> : vector<8x128xf32>
    %161 = tpu.matmul %160, %8, %cst_48 {dimension_numbers = #tpu.dot_dimension_numbers<[1], [0], [0], [1], [0, 0, 1, 1], [], []>} : vector<8x32xbf16>, vector<32x128xbf16>, vector<8x128xf32> -> vector<8x128xf32>
    %162 = arith.addf %159, %161 : vector<8x128xf32>
    %163 = vector.extract_strided_slice %162 {offsets = [0, 0], sizes = [8, 96], strides = [1, 1]} : vector<8x128xf32> to vector<8x96xf32>
    %cst_49 = arith.constant 5.000000e-01 : f32
    %164 = vector.broadcast %cst_49 : f32 to vector<8x96xf32>
    %165 = arith.mulf %164, %163 : vector<8x96xf32>
    %166 = math.tanh %165 : vector<8x96xf32>
    %cst_50 = arith.constant 1.000000e+00 : f32
    %167 = vector.broadcast %cst_50 : f32 to vector<8x96xf32>
    %168 = arith.addf %166, %167 : vector<8x96xf32>
    %cst_51 = arith.constant 5.000000e-01 : f32
    %169 = vector.broadcast %cst_51 : f32 to vector<8x96xf32>
    %170 = arith.mulf %169, %168 : vector<8x96xf32>
    %171 = vector.extract_strided_slice %170 {offsets = [0, 0], sizes = [8, 32], strides = [1, 1]} : vector<8x96xf32> to vector<8x32xf32>
    %172 = vector.extract_strided_slice %170 {offsets = [0, 32], sizes = [8, 32], strides = [1, 1]} : vector<8x96xf32> to vector<8x32xf32>
    %173 = vector.extract_strided_slice %170 {offsets = [0, 64], sizes = [8, 32], strides = [1, 1]} : vector<8x96xf32> to vector<8x32xf32>
    %174 = vector.extract_strided_slice %162 {offsets = [0, 96], sizes = [8, 32], strides = [1, 1]} : vector<8x128xf32> to vector<8x32xf32>
    %175 = math.tanh %174 : vector<8x32xf32>
    %176 = arith.mulf %172, %132 : vector<8x32xf32>
    %177 = arith.mulf %171, %175 : vector<8x32xf32>
    %178 = arith.addf %176, %177 : vector<8x32xf32>
    %179 = math.tanh %178 : vector<8x32xf32>
    %180 = arith.mulf %173, %179 : vector<8x32xf32>
    %181 = arith.truncf %180 : vector<8x32xf32> to vector<8x32xbf16>
    %cst_52 = arith.constant dense<0.000000e+00> : vector<8x128xf32>
    %182 = tpu.matmul %181, %10, %cst_52 {dimension_numbers = #tpu.dot_dimension_numbers<[1], [0], [0], [1], [0, 0, 1, 1], [], []>} : vector<8x32xbf16>, vector<32x128xbf16>, vector<8x128xf32> -> vector<8x128xf32>
    %183 = arith.truncf %158 : vector<8x32xf32> to vector<8x32xbf16>
    %cst_53 = arith.constant dense<0.000000e+00> : vector<8x128xf32>
    %184 = tpu.matmul %183, %12, %cst_53 {dimension_numbers = #tpu.dot_dimension_numbers<[1], [0], [0], [1], [0, 0, 1, 1], [], []>} : vector<8x32xbf16>, vector<32x128xbf16>, vector<8x128xf32> -> vector<8x128xf32>
    %185 = arith.addf %182, %184 : vector<8x128xf32>
    %186 = arith.addf %185, %16 : vector<8x128xf32>
    %187 = vector.extract_strided_slice %186 {offsets = [0, 0], sizes = [8, 96], strides = [1, 1]} : vector<8x128xf32> to vector<8x96xf32>
    %cst_54 = arith.constant 5.000000e-01 : f32
    %188 = vector.broadcast %cst_54 : f32 to vector<8x96xf32>
    %189 = arith.mulf %188, %187 : vector<8x96xf32>
    %190 = math.tanh %189 : vector<8x96xf32>
    %cst_55 = arith.constant 1.000000e+00 : f32
    %191 = vector.broadcast %cst_55 : f32 to vector<8x96xf32>
    %192 = arith.addf %190, %191 : vector<8x96xf32>
    %cst_56 = arith.constant 5.000000e-01 : f32
    %193 = vector.broadcast %cst_56 : f32 to vector<8x96xf32>
    %194 = arith.mulf %193, %192 : vector<8x96xf32>
    %195 = vector.extract_strided_slice %194 {offsets = [0, 0], sizes = [8, 32], strides = [1, 1]} : vector<8x96xf32> to vector<8x32xf32>
    %196 = vector.extract_strided_slice %194 {offsets = [0, 32], sizes = [8, 32], strides = [1, 1]} : vector<8x96xf32> to vector<8x32xf32>
    %197 = vector.extract_strided_slice %194 {offsets = [0, 64], sizes = [8, 32], strides = [1, 1]} : vector<8x96xf32> to vector<8x32xf32>
    %198 = vector.extract_strided_slice %186 {offsets = [0, 96], sizes = [8, 32], strides = [1, 1]} : vector<8x128xf32> to vector<8x32xf32>
    %199 = math.tanh %198 : vector<8x32xf32>
    %200 = arith.mulf %196, %156 : vector<8x32xf32>
    %201 = arith.mulf %195, %199 : vector<8x32xf32>
    %202 = arith.addf %200, %201 : vector<8x32xf32>
    %203 = math.tanh %202 : vector<8x32xf32>
    %204 = arith.mulf %197, %203 : vector<8x32xf32>
    %205 = vector.extract_strided_slice %7 {offsets = [32, 0], sizes = [8, 128], strides = [1, 1]} : vector<64x128xf32> to vector<8x128xf32>
    %206 = arith.truncf %180 : vector<8x32xf32> to vector<8x32xbf16>
    %cst_57 = arith.constant dense<0.000000e+00> : vector<8x128xf32>
    %207 = tpu.matmul %206, %8, %cst_57 {dimension_numbers = #tpu.dot_dimension_numbers<[1], [0], [0], [1], [0, 0, 1, 1], [], []>} : vector<8x32xbf16>, vector<32x128xbf16>, vector<8x128xf32> -> vector<8x128xf32>
    %208 = arith.addf %205, %207 : vector<8x128xf32>
    %209 = vector.extract_strided_slice %208 {offsets = [0, 0], sizes = [8, 96], strides = [1, 1]} : vector<8x128xf32> to vector<8x96xf32>
    %cst_58 = arith.constant 5.000000e-01 : f32
    %210 = vector.broadcast %cst_58 : f32 to vector<8x96xf32>
    %211 = arith.mulf %210, %209 : vector<8x96xf32>
    %212 = math.tanh %211 : vector<8x96xf32>
    %cst_59 = arith.constant 1.000000e+00 : f32
    %213 = vector.broadcast %cst_59 : f32 to vector<8x96xf32>
    %214 = arith.addf %212, %213 : vector<8x96xf32>
    %cst_60 = arith.constant 5.000000e-01 : f32
    %215 = vector.broadcast %cst_60 : f32 to vector<8x96xf32>
    %216 = arith.mulf %215, %214 : vector<8x96xf32>
    %217 = vector.extract_strided_slice %216 {offsets = [0, 0], sizes = [8, 32], strides = [1, 1]} : vector<8x96xf32> to vector<8x32xf32>
    %218 = vector.extract_strided_slice %216 {offsets = [0, 32], sizes = [8, 32], strides = [1, 1]} : vector<8x96xf32> to vector<8x32xf32>
    %219 = vector.extract_strided_slice %216 {offsets = [0, 64], sizes = [8, 32], strides = [1, 1]} : vector<8x96xf32> to vector<8x32xf32>
    %220 = vector.extract_strided_slice %208 {offsets = [0, 96], sizes = [8, 32], strides = [1, 1]} : vector<8x128xf32> to vector<8x32xf32>
    %221 = math.tanh %220 : vector<8x32xf32>
    %222 = arith.mulf %218, %178 : vector<8x32xf32>
    %223 = arith.mulf %217, %221 : vector<8x32xf32>
    %224 = arith.addf %222, %223 : vector<8x32xf32>
    %225 = math.tanh %224 : vector<8x32xf32>
    %226 = arith.mulf %219, %225 : vector<8x32xf32>
    %227 = arith.truncf %226 : vector<8x32xf32> to vector<8x32xbf16>
    %cst_61 = arith.constant dense<0.000000e+00> : vector<8x128xf32>
    %228 = tpu.matmul %227, %10, %cst_61 {dimension_numbers = #tpu.dot_dimension_numbers<[1], [0], [0], [1], [0, 0, 1, 1], [], []>} : vector<8x32xbf16>, vector<32x128xbf16>, vector<8x128xf32> -> vector<8x128xf32>
    %229 = arith.truncf %204 : vector<8x32xf32> to vector<8x32xbf16>
    %cst_62 = arith.constant dense<0.000000e+00> : vector<8x128xf32>
    %230 = tpu.matmul %229, %12, %cst_62 {dimension_numbers = #tpu.dot_dimension_numbers<[1], [0], [0], [1], [0, 0, 1, 1], [], []>} : vector<8x32xbf16>, vector<32x128xbf16>, vector<8x128xf32> -> vector<8x128xf32>
    %231 = arith.addf %228, %230 : vector<8x128xf32>
    %232 = arith.addf %231, %16 : vector<8x128xf32>
    %233 = vector.extract_strided_slice %232 {offsets = [0, 0], sizes = [8, 96], strides = [1, 1]} : vector<8x128xf32> to vector<8x96xf32>
    %cst_63 = arith.constant 5.000000e-01 : f32
    %234 = vector.broadcast %cst_63 : f32 to vector<8x96xf32>
    %235 = arith.mulf %234, %233 : vector<8x96xf32>
    %236 = math.tanh %235 : vector<8x96xf32>
    %cst_64 = arith.constant 1.000000e+00 : f32
    %237 = vector.broadcast %cst_64 : f32 to vector<8x96xf32>
    %238 = arith.addf %236, %237 : vector<8x96xf32>
    %cst_65 = arith.constant 5.000000e-01 : f32
    %239 = vector.broadcast %cst_65 : f32 to vector<8x96xf32>
    %240 = arith.mulf %239, %238 : vector<8x96xf32>
    %241 = vector.extract_strided_slice %240 {offsets = [0, 0], sizes = [8, 32], strides = [1, 1]} : vector<8x96xf32> to vector<8x32xf32>
    %242 = vector.extract_strided_slice %240 {offsets = [0, 32], sizes = [8, 32], strides = [1, 1]} : vector<8x96xf32> to vector<8x32xf32>
    %243 = vector.extract_strided_slice %240 {offsets = [0, 64], sizes = [8, 32], strides = [1, 1]} : vector<8x96xf32> to vector<8x32xf32>
    %244 = vector.extract_strided_slice %232 {offsets = [0, 96], sizes = [8, 32], strides = [1, 1]} : vector<8x128xf32> to vector<8x32xf32>
    %245 = math.tanh %244 : vector<8x32xf32>
    %246 = arith.mulf %242, %202 : vector<8x32xf32>
    %247 = arith.mulf %241, %245 : vector<8x32xf32>
    %248 = arith.addf %246, %247 : vector<8x32xf32>
    %249 = math.tanh %248 : vector<8x32xf32>
    %250 = arith.mulf %243, %249 : vector<8x32xf32>
    %251 = vector.extract_strided_slice %7 {offsets = [40, 0], sizes = [8, 128], strides = [1, 1]} : vector<64x128xf32> to vector<8x128xf32>
    %252 = arith.truncf %226 : vector<8x32xf32> to vector<8x32xbf16>
    %cst_66 = arith.constant dense<0.000000e+00> : vector<8x128xf32>
    %253 = tpu.matmul %252, %8, %cst_66 {dimension_numbers = #tpu.dot_dimension_numbers<[1], [0], [0], [1], [0, 0, 1, 1], [], []>} : vector<8x32xbf16>, vector<32x128xbf16>, vector<8x128xf32> -> vector<8x128xf32>
    %254 = arith.addf %251, %253 : vector<8x128xf32>
    %255 = vector.extract_strided_slice %254 {offsets = [0, 0], sizes = [8, 96], strides = [1, 1]} : vector<8x128xf32> to vector<8x96xf32>
    %cst_67 = arith.constant 5.000000e-01 : f32
    %256 = vector.broadcast %cst_67 : f32 to vector<8x96xf32>
    %257 = arith.mulf %256, %255 : vector<8x96xf32>
    %258 = math.tanh %257 : vector<8x96xf32>
    %cst_68 = arith.constant 1.000000e+00 : f32
    %259 = vector.broadcast %cst_68 : f32 to vector<8x96xf32>
    %260 = arith.addf %258, %259 : vector<8x96xf32>
    %cst_69 = arith.constant 5.000000e-01 : f32
    %261 = vector.broadcast %cst_69 : f32 to vector<8x96xf32>
    %262 = arith.mulf %261, %260 : vector<8x96xf32>
    %263 = vector.extract_strided_slice %262 {offsets = [0, 0], sizes = [8, 32], strides = [1, 1]} : vector<8x96xf32> to vector<8x32xf32>
    %264 = vector.extract_strided_slice %262 {offsets = [0, 32], sizes = [8, 32], strides = [1, 1]} : vector<8x96xf32> to vector<8x32xf32>
    %265 = vector.extract_strided_slice %262 {offsets = [0, 64], sizes = [8, 32], strides = [1, 1]} : vector<8x96xf32> to vector<8x32xf32>
    %266 = vector.extract_strided_slice %254 {offsets = [0, 96], sizes = [8, 32], strides = [1, 1]} : vector<8x128xf32> to vector<8x32xf32>
    %267 = math.tanh %266 : vector<8x32xf32>
    %268 = arith.mulf %264, %224 : vector<8x32xf32>
    %269 = arith.mulf %263, %267 : vector<8x32xf32>
    %270 = arith.addf %268, %269 : vector<8x32xf32>
    %271 = math.tanh %270 : vector<8x32xf32>
    %272 = arith.mulf %265, %271 : vector<8x32xf32>
    %273 = arith.truncf %272 : vector<8x32xf32> to vector<8x32xbf16>
    %cst_70 = arith.constant dense<0.000000e+00> : vector<8x128xf32>
    %274 = tpu.matmul %273, %10, %cst_70 {dimension_numbers = #tpu.dot_dimension_numbers<[1], [0], [0], [1], [0, 0, 1, 1], [], []>} : vector<8x32xbf16>, vector<32x128xbf16>, vector<8x128xf32> -> vector<8x128xf32>
    %275 = arith.truncf %250 : vector<8x32xf32> to vector<8x32xbf16>
    %cst_71 = arith.constant dense<0.000000e+00> : vector<8x128xf32>
    %276 = tpu.matmul %275, %12, %cst_71 {dimension_numbers = #tpu.dot_dimension_numbers<[1], [0], [0], [1], [0, 0, 1, 1], [], []>} : vector<8x32xbf16>, vector<32x128xbf16>, vector<8x128xf32> -> vector<8x128xf32>
    %277 = arith.addf %274, %276 : vector<8x128xf32>
    %278 = arith.addf %277, %16 : vector<8x128xf32>
    %279 = vector.extract_strided_slice %278 {offsets = [0, 0], sizes = [8, 96], strides = [1, 1]} : vector<8x128xf32> to vector<8x96xf32>
    %cst_72 = arith.constant 5.000000e-01 : f32
    %280 = vector.broadcast %cst_72 : f32 to vector<8x96xf32>
    %281 = arith.mulf %280, %279 : vector<8x96xf32>
    %282 = math.tanh %281 : vector<8x96xf32>
    %cst_73 = arith.constant 1.000000e+00 : f32
    %283 = vector.broadcast %cst_73 : f32 to vector<8x96xf32>
    %284 = arith.addf %282, %283 : vector<8x96xf32>
    %cst_74 = arith.constant 5.000000e-01 : f32
    %285 = vector.broadcast %cst_74 : f32 to vector<8x96xf32>
    %286 = arith.mulf %285, %284 : vector<8x96xf32>
    %287 = vector.extract_strided_slice %286 {offsets = [0, 0], sizes = [8, 32], strides = [1, 1]} : vector<8x96xf32> to vector<8x32xf32>
    %288 = vector.extract_strided_slice %286 {offsets = [0, 32], sizes = [8, 32], strides = [1, 1]} : vector<8x96xf32> to vector<8x32xf32>
    %289 = vector.extract_strided_slice %286 {offsets = [0, 64], sizes = [8, 32], strides = [1, 1]} : vector<8x96xf32> to vector<8x32xf32>
    %290 = vector.extract_strided_slice %278 {offsets = [0, 96], sizes = [8, 32], strides = [1, 1]} : vector<8x128xf32> to vector<8x32xf32>
    %291 = math.tanh %290 : vector<8x32xf32>
    %292 = arith.mulf %288, %248 : vector<8x32xf32>
    %293 = arith.mulf %287, %291 : vector<8x32xf32>
    %294 = arith.addf %292, %293 : vector<8x32xf32>
    %295 = math.tanh %294 : vector<8x32xf32>
    %296 = arith.mulf %289, %295 : vector<8x32xf32>
    %297 = vector.extract_strided_slice %7 {offsets = [48, 0], sizes = [8, 128], strides = [1, 1]} : vector<64x128xf32> to vector<8x128xf32>
    %298 = arith.truncf %272 : vector<8x32xf32> to vector<8x32xbf16>
    %cst_75 = arith.constant dense<0.000000e+00> : vector<8x128xf32>
    %299 = tpu.matmul %298, %8, %cst_75 {dimension_numbers = #tpu.dot_dimension_numbers<[1], [0], [0], [1], [0, 0, 1, 1], [], []>} : vector<8x32xbf16>, vector<32x128xbf16>, vector<8x128xf32> -> vector<8x128xf32>
    %300 = arith.addf %297, %299 : vector<8x128xf32>
    %301 = vector.extract_strided_slice %300 {offsets = [0, 0], sizes = [8, 96], strides = [1, 1]} : vector<8x128xf32> to vector<8x96xf32>
    %cst_76 = arith.constant 5.000000e-01 : f32
    %302 = vector.broadcast %cst_76 : f32 to vector<8x96xf32>
    %303 = arith.mulf %302, %301 : vector<8x96xf32>
    %304 = math.tanh %303 : vector<8x96xf32>
    %cst_77 = arith.constant 1.000000e+00 : f32
    %305 = vector.broadcast %cst_77 : f32 to vector<8x96xf32>
    %306 = arith.addf %304, %305 : vector<8x96xf32>
    %cst_78 = arith.constant 5.000000e-01 : f32
    %307 = vector.broadcast %cst_78 : f32 to vector<8x96xf32>
    %308 = arith.mulf %307, %306 : vector<8x96xf32>
    %309 = vector.extract_strided_slice %308 {offsets = [0, 0], sizes = [8, 32], strides = [1, 1]} : vector<8x96xf32> to vector<8x32xf32>
    %310 = vector.extract_strided_slice %308 {offsets = [0, 32], sizes = [8, 32], strides = [1, 1]} : vector<8x96xf32> to vector<8x32xf32>
    %311 = vector.extract_strided_slice %308 {offsets = [0, 64], sizes = [8, 32], strides = [1, 1]} : vector<8x96xf32> to vector<8x32xf32>
    %312 = vector.extract_strided_slice %300 {offsets = [0, 96], sizes = [8, 32], strides = [1, 1]} : vector<8x128xf32> to vector<8x32xf32>
    %313 = math.tanh %312 : vector<8x32xf32>
    %314 = arith.mulf %310, %270 : vector<8x32xf32>
    %315 = arith.mulf %309, %313 : vector<8x32xf32>
    %316 = arith.addf %314, %315 : vector<8x32xf32>
    %317 = math.tanh %316 : vector<8x32xf32>
    %318 = arith.mulf %311, %317 : vector<8x32xf32>
    %319 = arith.truncf %318 : vector<8x32xf32> to vector<8x32xbf16>
    %cst_79 = arith.constant dense<0.000000e+00> : vector<8x128xf32>
    %320 = tpu.matmul %319, %10, %cst_79 {dimension_numbers = #tpu.dot_dimension_numbers<[1], [0], [0], [1], [0, 0, 1, 1], [], []>} : vector<8x32xbf16>, vector<32x128xbf16>, vector<8x128xf32> -> vector<8x128xf32>
    %321 = arith.truncf %296 : vector<8x32xf32> to vector<8x32xbf16>
    %cst_80 = arith.constant dense<0.000000e+00> : vector<8x128xf32>
    %322 = tpu.matmul %321, %12, %cst_80 {dimension_numbers = #tpu.dot_dimension_numbers<[1], [0], [0], [1], [0, 0, 1, 1], [], []>} : vector<8x32xbf16>, vector<32x128xbf16>, vector<8x128xf32> -> vector<8x128xf32>
    %323 = arith.addf %320, %322 : vector<8x128xf32>
    %324 = arith.addf %323, %16 : vector<8x128xf32>
    %325 = vector.extract_strided_slice %324 {offsets = [0, 0], sizes = [8, 96], strides = [1, 1]} : vector<8x128xf32> to vector<8x96xf32>
    %cst_81 = arith.constant 5.000000e-01 : f32
    %326 = vector.broadcast %cst_81 : f32 to vector<8x96xf32>
    %327 = arith.mulf %326, %325 : vector<8x96xf32>
    %328 = math.tanh %327 : vector<8x96xf32>
    %cst_82 = arith.constant 1.000000e+00 : f32
    %329 = vector.broadcast %cst_82 : f32 to vector<8x96xf32>
    %330 = arith.addf %328, %329 : vector<8x96xf32>
    %cst_83 = arith.constant 5.000000e-01 : f32
    %331 = vector.broadcast %cst_83 : f32 to vector<8x96xf32>
    %332 = arith.mulf %331, %330 : vector<8x96xf32>
    %333 = vector.extract_strided_slice %332 {offsets = [0, 0], sizes = [8, 32], strides = [1, 1]} : vector<8x96xf32> to vector<8x32xf32>
    %334 = vector.extract_strided_slice %332 {offsets = [0, 32], sizes = [8, 32], strides = [1, 1]} : vector<8x96xf32> to vector<8x32xf32>
    %335 = vector.extract_strided_slice %332 {offsets = [0, 64], sizes = [8, 32], strides = [1, 1]} : vector<8x96xf32> to vector<8x32xf32>
    %336 = vector.extract_strided_slice %324 {offsets = [0, 96], sizes = [8, 32], strides = [1, 1]} : vector<8x128xf32> to vector<8x32xf32>
    %337 = math.tanh %336 : vector<8x32xf32>
    %338 = arith.mulf %334, %294 : vector<8x32xf32>
    %339 = arith.mulf %333, %337 : vector<8x32xf32>
    %340 = arith.addf %338, %339 : vector<8x32xf32>
    %341 = math.tanh %340 : vector<8x32xf32>
    %342 = arith.mulf %335, %341 : vector<8x32xf32>
    %343 = vector.extract_strided_slice %7 {offsets = [56, 0], sizes = [8, 128], strides = [1, 1]} : vector<64x128xf32> to vector<8x128xf32>
    %344 = arith.truncf %318 : vector<8x32xf32> to vector<8x32xbf16>
    %cst_84 = arith.constant dense<0.000000e+00> : vector<8x128xf32>
    %345 = tpu.matmul %344, %8, %cst_84 {dimension_numbers = #tpu.dot_dimension_numbers<[1], [0], [0], [1], [0, 0, 1, 1], [], []>} : vector<8x32xbf16>, vector<32x128xbf16>, vector<8x128xf32> -> vector<8x128xf32>
    %346 = arith.addf %343, %345 : vector<8x128xf32>
    %347 = vector.extract_strided_slice %346 {offsets = [0, 0], sizes = [8, 96], strides = [1, 1]} : vector<8x128xf32> to vector<8x96xf32>
    %cst_85 = arith.constant 5.000000e-01 : f32
    %348 = vector.broadcast %cst_85 : f32 to vector<8x96xf32>
    %349 = arith.mulf %348, %347 : vector<8x96xf32>
    %350 = math.tanh %349 : vector<8x96xf32>
    %cst_86 = arith.constant 1.000000e+00 : f32
    %351 = vector.broadcast %cst_86 : f32 to vector<8x96xf32>
    %352 = arith.addf %350, %351 : vector<8x96xf32>
    %cst_87 = arith.constant 5.000000e-01 : f32
    %353 = vector.broadcast %cst_87 : f32 to vector<8x96xf32>
    %354 = arith.mulf %353, %352 : vector<8x96xf32>
    %355 = vector.extract_strided_slice %354 {offsets = [0, 0], sizes = [8, 32], strides = [1, 1]} : vector<8x96xf32> to vector<8x32xf32>
    %356 = vector.extract_strided_slice %354 {offsets = [0, 32], sizes = [8, 32], strides = [1, 1]} : vector<8x96xf32> to vector<8x32xf32>
    %357 = vector.extract_strided_slice %354 {offsets = [0, 64], sizes = [8, 32], strides = [1, 1]} : vector<8x96xf32> to vector<8x32xf32>
    %358 = vector.extract_strided_slice %346 {offsets = [0, 96], sizes = [8, 32], strides = [1, 1]} : vector<8x128xf32> to vector<8x32xf32>
    %359 = math.tanh %358 : vector<8x32xf32>
    %360 = arith.mulf %356, %316 : vector<8x32xf32>
    %361 = arith.mulf %355, %359 : vector<8x32xf32>
    %362 = arith.addf %360, %361 : vector<8x32xf32>
    %363 = math.tanh %362 : vector<8x32xf32>
    %364 = arith.mulf %357, %363 : vector<8x32xf32>
    %365 = arith.truncf %364 : vector<8x32xf32> to vector<8x32xbf16>
    %cst_88 = arith.constant dense<0.000000e+00> : vector<8x128xf32>
    %366 = tpu.matmul %365, %10, %cst_88 {dimension_numbers = #tpu.dot_dimension_numbers<[1], [0], [0], [1], [0, 0, 1, 1], [], []>} : vector<8x32xbf16>, vector<32x128xbf16>, vector<8x128xf32> -> vector<8x128xf32>
    %367 = arith.truncf %342 : vector<8x32xf32> to vector<8x32xbf16>
    %cst_89 = arith.constant dense<0.000000e+00> : vector<8x128xf32>
    %368 = tpu.matmul %367, %12, %cst_89 {dimension_numbers = #tpu.dot_dimension_numbers<[1], [0], [0], [1], [0, 0, 1, 1], [], []>} : vector<8x32xbf16>, vector<32x128xbf16>, vector<8x128xf32> -> vector<8x128xf32>
    %369 = arith.addf %366, %368 : vector<8x128xf32>
    %370 = arith.addf %369, %16 : vector<8x128xf32>
    %371 = vector.extract_strided_slice %370 {offsets = [0, 0], sizes = [8, 96], strides = [1, 1]} : vector<8x128xf32> to vector<8x96xf32>
    %cst_90 = arith.constant 5.000000e-01 : f32
    %372 = vector.broadcast %cst_90 : f32 to vector<8x96xf32>
    %373 = arith.mulf %372, %371 : vector<8x96xf32>
    %374 = math.tanh %373 : vector<8x96xf32>
    %cst_91 = arith.constant 1.000000e+00 : f32
    %375 = vector.broadcast %cst_91 : f32 to vector<8x96xf32>
    %376 = arith.addf %374, %375 : vector<8x96xf32>
    %cst_92 = arith.constant 5.000000e-01 : f32
    %377 = vector.broadcast %cst_92 : f32 to vector<8x96xf32>
    %378 = arith.mulf %377, %376 : vector<8x96xf32>
    %379 = vector.extract_strided_slice %378 {offsets = [0, 0], sizes = [8, 32], strides = [1, 1]} : vector<8x96xf32> to vector<8x32xf32>
    %380 = vector.extract_strided_slice %378 {offsets = [0, 32], sizes = [8, 32], strides = [1, 1]} : vector<8x96xf32> to vector<8x32xf32>
    %381 = vector.extract_strided_slice %378 {offsets = [0, 64], sizes = [8, 32], strides = [1, 1]} : vector<8x96xf32> to vector<8x32xf32>
    %382 = vector.extract_strided_slice %370 {offsets = [0, 96], sizes = [8, 32], strides = [1, 1]} : vector<8x128xf32> to vector<8x32xf32>
    %383 = math.tanh %382 : vector<8x32xf32>
    %384 = arith.mulf %380, %340 : vector<8x32xf32>
    %385 = arith.mulf %379, %383 : vector<8x32xf32>
    %386 = arith.addf %384, %385 : vector<8x32xf32>
    %387 = math.tanh %386 : vector<8x32xf32>
    %388 = arith.mulf %381, %387 : vector<8x32xf32>
    %c0_93 = arith.constant 0 : index
    %c0_94 = arith.constant 0 : index
    %389 = vector.load %arg8[%c0_93, %c0_94] : memref<32x64xbf16, #tpu.memory_space<vmem>>, vector<32x64xbf16>
    %390 = arith.truncf %388 : vector<8x32xf32> to vector<8x32xbf16>
    %cst_95 = arith.constant dense<0.000000e+00> : vector<8x64xf32>
    %391 = tpu.matmul %390, %389, %cst_95 {dimension_numbers = #tpu.dot_dimension_numbers<[1], [0], [0], [1], [0, 0, 1, 1], [], []>} : vector<8x32xbf16>, vector<32x64xbf16>, vector<8x64xf32> -> vector<8x64xf32>
    %c0_96 = arith.constant 0 : index
    %c0_97 = arith.constant 0 : index
    %392 = vector.load %arg9[%c0_96, %c0_97] : memref<1x64xf32, #tpu.memory_space<vmem>>, vector<1x64xf32>
    %393 = vector.broadcast %392 : vector<1x64xf32> to vector<8x64xf32>
    %394 = arith.addf %391, %393 : vector<8x64xf32>
    %cst_98 = arith.constant 0.000000e+00 : f32
    %395 = vector.broadcast %cst_98 : f32 to vector<8x64xf32>
    %396 = arith.maximumf %394, %395 : vector<8x64xf32>
    %c0_99 = arith.constant 0 : index
    %c0_100 = arith.constant 0 : index
    %397 = vector.load %arg10[%c0_99, %c0_100] : memref<64x128xbf16, #tpu.memory_space<vmem>>, vector<64x128xbf16>
    %398 = arith.truncf %396 : vector<8x64xf32> to vector<8x64xbf16>
    %cst_101 = arith.constant dense<0.000000e+00> : vector<8x128xf32>
    %399 = tpu.matmul %398, %397, %cst_101 {dimension_numbers = #tpu.dot_dimension_numbers<[1], [0], [0], [1], [0, 0, 1, 1], [], []>} : vector<8x64xbf16>, vector<64x128xbf16>, vector<8x128xf32> -> vector<8x128xf32>
    %c0_102 = arith.constant 0 : index
    %c0_103 = arith.constant 0 : index
    %400 = vector.load %arg11[%c0_102, %c0_103] : memref<1x128xf32, #tpu.memory_space<vmem>>, vector<1x128xf32>
    %401 = vector.broadcast %400 : vector<1x128xf32> to vector<8x128xf32>
    %402 = arith.addf %399, %401 : vector<8x128xf32>
    %c0_104 = arith.constant 0 : index
    %c0_105 = arith.constant 0 : index
    %403 = vector.load %arg12[%c0_104, %c0_105] : memref<8x128xf32, #tpu.memory_space<vmem>>, vector<8x128xf32>
    tpu.vector_store %arg12[%c0_104, %c0_105], %402 {strides = array<i32>} : memref<8x128xf32, #tpu.memory_space<vmem>>, vector<8x128xf32>,
    return
  }
  func.func @transform_0(%arg0: i32) -> (i32, i32, i32) {
    %c0_i32 = arith.constant 0 : i32
    %c0_i32_0 = arith.constant 0 : i32
    %c0_i32_1 = arith.constant 0 : i32
    return %c0_i32, %arg0, %c0_i32_0 : i32, i32, i32
  }
  func.func @transform_1(%arg0: i32) -> (i32, i32) {
    %c0_i32 = arith.constant 0 : i32
    %c0_i32_0 = arith.constant 0 : i32
    %c0_i32_1 = arith.constant 0 : i32
    return %c0_i32, %c0_i32_0 : i32, i32
  }
  func.func @transform_2(%arg0: i32) -> (i32, i32) {
    %c0_i32 = arith.constant 0 : i32
    %c0_i32_0 = arith.constant 0 : i32
    %c0_i32_1 = arith.constant 0 : i32
    return %c0_i32, %c0_i32_0 : i32, i32
  }
  func.func @transform_3(%arg0: i32) -> (i32, i32) {
    %c0_i32 = arith.constant 0 : i32
    %c0_i32_0 = arith.constant 0 : i32
    %c0_i32_1 = arith.constant 0 : i32
    return %c0_i32, %c0_i32_0 : i32, i32
  }
  func.func @transform_4(%arg0: i32) -> (i32, i32, i32) {
    %c0_i32 = arith.constant 0 : i32
    %c0_i32_0 = arith.constant 0 : i32
    %c0_i32_1 = arith.constant 0 : i32
    %c0_i32_2 = arith.constant 0 : i32
    return %c0_i32, %c0_i32_0, %c0_i32_1 : i32, i32, i32
  }
  func.func @transform_5(%arg0: i32) -> (i32, i32, i32) {
    %c0_i32 = arith.constant 0 : i32
    %c0_i32_0 = arith.constant 0 : i32
    %c0_i32_1 = arith.constant 0 : i32
    %c0_i32_2 = arith.constant 0 : i32
    return %c0_i32, %c0_i32_0, %c0_i32_1 : i32, i32, i32
  }
  func.func @transform_6(%arg0: i32) -> (i32, i32, i32) {
    %c0_i32 = arith.constant 0 : i32
    %c0_i32_0 = arith.constant 0 : i32
    %c0_i32_1 = arith.constant 0 : i32
    %c0_i32_2 = arith.constant 0 : i32
    return %c0_i32, %c0_i32_0, %c0_i32_1 : i32, i32, i32
  }
  func.func @transform_7(%arg0: i32) -> (i32, i32) {
    %c0_i32 = arith.constant 0 : i32
    %c0_i32_0 = arith.constant 0 : i32
    %c0_i32_1 = arith.constant 0 : i32
    return %c0_i32, %c0_i32_0 : i32, i32
  }
  func.func @transform_8(%arg0: i32) -> (i32, i32) {
    %c0_i32 = arith.constant 0 : i32
    %c0_i32_0 = arith.constant 0 : i32
    %c0_i32_1 = arith.constant 0 : i32
    return %c0_i32, %c0_i32_0 : i32, i32
  }
  func.func @transform_9(%arg0: i32) -> (i32, i32) {
    %c0_i32 = arith.constant 0 : i32
    %c0_i32_0 = arith.constant 0 : i32
    %c0_i32_1 = arith.constant 0 : i32
    return %c0_i32, %c0_i32_0 : i32, i32
  }
  func.func @transform_10(%arg0: i32) -> (i32, i32) {
    %c0_i32 = arith.constant 0 : i32
    %c0_i32_0 = arith.constant 0 : i32
    %c0_i32_1 = arith.constant 0 : i32
    return %c0_i32, %c0_i32_0 : i32, i32
  }
  func.func @transform_11(%arg0: i32) -> (i32, i32) {
    %c0_i32 = arith.constant 0 : i32
    %c0_i32_0 = arith.constant 0 : i32
    return %arg0, %c0_i32 : i32, i32
  }
}

</mosaic_0001>

<llo_original>
// kernel: tpu_custom_call.1
$region0: #{tpu_custom_call.1}
  #allocation0 [shape = 'u32[]', space=smem, size = 0x4, offset = 0x4, fixed_abs, tag = 'smem constant byte address 0x4 - core index']
  #allocation1 [shape = 'u32[144,128]{1,0:T(1,128)}', space=vmem, size = 0x12000, scoped, tag = 'internal scratch']
  %s0 = inlined_call_operand.hbm [shape: f32[8,8,32], index: 0, kind: input, shape index: {}]
  %s1 = inlined_call_operand.hbm [shape: bf16[32,128], index: 1, kind: input, shape index: {}]
  %s2 = inlined_call_operand.vmem [shape: f32[1,128], index: 2, kind: input, shape index: {}]
  %s3 = inlined_call_operand.hbm [shape: bf16[32,128], index: 3, kind: input, shape index: {}]
  %s4 = inlined_call_operand.hbm [shape: bf16[1,32,128], index: 4, kind: input, shape index: {}]
  %s5 = inlined_call_operand.hbm [shape: bf16[1,32,128], index: 5, kind: input, shape index: {}]
  %s6 = inlined_call_operand.vmem [shape: f32[1,1,128], index: 6, kind: input, shape index: {}]
  %s7 = inlined_call_operand.hbm [shape: bf16[32,64], index: 7, kind: input, shape index: {}]
  %s8 = inlined_call_operand.vmem [shape: f32[1,64], index: 8, kind: input, shape index: {}]
  %s9 = inlined_call_operand.hbm [shape: bf16[64,128], index: 9, kind: input, shape index: {}]
  %s10 = inlined_call_operand.vmem [shape: f32[1,128], index: 10, kind: input, shape index: {}]
  %s11 = inlined_call_operand.hbm [shape: f32[8,128], index: 11, kind: output, shape index: {}]
  %s12 = sld [smem:[#allocation0]]
  $region82: #{tpu_custom_call.1} parent=0
    _
  %s14 = ssub.s32 1, %s12
  %s15 = scalar_select 0, %s14, %s12
  $region1: #{tpu_custom_call.1} parent=0
    #allocation2 [shape = 'u8[32768]{0}', space=vmem, size = 0x8000, scoped, tag = 'input window, operand 0, single buffered']
    #allocation3 [shape = 's32[1]{0}', space=sflag, size = 0x4, scoped, tag = 'scoped memory for tpu_custom_call.1']
    #allocation4 [shape = 's32[1]{0}', space=sflag, size = 0x4, scoped, tag = 'scoped memory for tpu_custom_call.1']
    #allocation5 [shape = 'u8[8192]{0}', space=vmem, size = 0x2000, scoped, tag = 'input window, operand 1, single buffered']
    #allocation6 [shape = 's32[1]{0}', space=sflag, size = 0x4, scoped, tag = 'scoped memory for tpu_custom_call.1']
    #allocation7 [shape = 'u8[8192]{0}', space=vmem, size = 0x2000, scoped, tag = 'input window, operand 3, single buffered']
    #allocation8 [shape = 'u8[8192]{0}', space=vmem, size = 0x2000, scoped, tag = 'input window, operand 4, single buffered']
    #allocation9 [shape = 's32[1]{0}', space=sflag, size = 0x4, scoped, tag = 'scoped memory for tpu_custom_call.1']
    #allocation10 [shape = 'u8[8192]{0}', space=vmem, size = 0x2000, scoped, tag = 'input window, operand 5, single buffered']
    #allocation11 [shape = 'u8[8192]{0}', space=vmem, size = 0x2000, scoped, tag = 'input window, operand 7, single buffered']
    #allocation12 [shape = 's32[1]{0}', space=sflag, size = 0x4, scoped, tag = 'scoped memory for tpu_custom_call.1']
    #allocation13 [shape = 'u8[16384]{0}', space=vmem, size = 0x4000, scoped, tag = 'input window, operand 9, single buffered']
    #allocation14 [shape = 'u8[4096]{0}', space=vmem, size = 0x1000, scoped, tag = 'output window, operand 0, single buffered']
    %16 = vsyncpa [#allocation3], 0
    %17 = vsyncpa [#allocation6], 0
    %18 = vsyncpa [#allocation9], 0
    %19 = vsyncpa [#allocation12], 0
    %20 = vsyncpa [#allocation4], 0
    // Predicated region
    $region2: #{tpu_custom_call.1} parent=1 // pred_check
      _
    $region3: #{tpu_custom_call.1} parent=1 // pred_check_branch
      %22 = sbr.rel (0) target = $region5
    $region4: #{tpu_custom_call.1} parent=1 // pred_region
      %s24 = ssub.s32 1024, 1024
      %25 = vsyncadd [#allocation3], %s24
      %s26 = sshll.u32 [#allocation2], 4
      %s27 = int_to_ptr.vmem [resolvable:$true] %s26
      %32 = dma.hbm_to_vmem [thread:$0]  %s0, 1024, %s27, [#allocation3], 128, 128, 8
    $region5: #{tpu_custom_call.1} parent=1 // pred_fallthru
      _
    // Predicated region
    $region6: #{tpu_custom_call.1} parent=1 // pred_check
      _
    $region7: #{tpu_custom_call.1} parent=1 // pred_check_branch
      %34 = sbr.rel (0) target = $region9
    $region8: #{tpu_custom_call.1} parent=1 // pred_region
      %s36 = ssub.s32 256, 256
      %37 = vsyncadd [#allocation6], %s36
      %s38 = sshll.u32 [#allocation5], 4
      %s39 = int_to_ptr.vmem [resolvable:$true] %s38
      %44 = dma.hbm_to_vmem [thread:$0]  %s1, 256, %s39, [#allocation6], 64, 64, 4
    $region9: #{tpu_custom_call.1} parent=1 // pred_fallthru
      _
    // Predicated region
    $region10: #{tpu_custom_call.1} parent=1 // pred_check
      _
    $region11: #{tpu_custom_call.1} parent=1 // pred_check_branch
      %46 = sbr.rel (0) target = $region13
    $region12: #{tpu_custom_call.1} parent=1 // pred_region
      _
    $region13: #{tpu_custom_call.1} parent=1 // pred_fallthru
      _
    // Predicated region
    $region14: #{tpu_custom_call.1} parent=1 // pred_check
      _
    $region15: #{tpu_custom_call.1} parent=1 // pred_check_branch
      %48 = sbr.rel (0) target = $region17
    $region16: #{tpu_custom_call.1} parent=1 // pred_region
      %s50 = ssub.s32 256, 256
      %51 = vsyncadd [#allocation6], %s50
      %s52 = sshll.u32 [#allocation7], 4
      %s53 = int_to_ptr.vmem [resolvable:$true] %s52
      %58 = dma.hbm_to_vmem [thread:$0]  %s3, 256, %s53, [#allocation6], 64, 64, 4
    $region17: #{tpu_custom_call.1} parent=1 // pred_fallthru
      _
    // Predicated region
    $region18: #{tpu_custom_call.1} parent=1 // pred_check
      _
    $region19: #{tpu_custom_call.1} parent=1 // pred_check_branch
      %60 = sbr.rel (0) target = $region21
    $region20: #{tpu_custom_call.1} parent=1 // pred_region
      %s62 = ssub.s32 256, 256
      %63 = vsyncadd [#allocation9], %s62
      %s64 = sshll.u32 [#allocation8], 4
      %s65 = int_to_ptr.vmem [resolvable:$true] %s64
      %70 = dma.hbm_to_vmem [thread:$0]  %s4, 256, %s65, [#allocation9], 64, 64, 4
    $region21: #{tpu_custom_call.1} parent=1 // pred_fallthru
      _
    // Predicated region
    $region22: #{tpu_custom_call.1} parent=1 // pred_check
      _
    $region23: #{tpu_custom_call.1} parent=1 // pred_check_branch
      %72 = sbr.rel (0) target = $region25
    $region24: #{tpu_custom_call.1} parent=1 // pred_region
      %s74 = ssub.s32 256, 256
      %75 = vsyncadd [#allocation9], %s74
      %s76 = sshll.u32 [#allocation10], 4
      %s77 = int_to_ptr.vmem [resolvable:$true] %s76
      %82 = dma.hbm_to_vmem [thread:$0]  %s5, 256, %s77, [#allocation9], 64, 64, 4
    $region25: #{tpu_custom_call.1} parent=1 // pred_fallthru
      _
    // Predicated region
    $region26: #{tpu_custom_call.1} parent=1 // pred_check
      _
    $region27: #{tpu_custom_call.1} parent=1 // pred_check_branch
      %84 = sbr.rel (0) target = $region29
    $region28: #{tpu_custom_call.1} parent=1 // pred_region
      _
    $region29: #{tpu_custom_call.1} parent=1 // pred_fallthru
      _
    // Predicated region
    $region30: #{tpu_custom_call.1} parent=1 // pred_check
      _
    $region31: #{tpu_custom_call.1} parent=1 // pred_check_branch
      %86 = sbr.rel (0) target = $region33
    $region32: #{tpu_custom_call.1} parent=1 // pred_region
      %s88 = ssub.s32 256, 256
      %89 = vsyncadd [#allocation12], %s88
      %s90 = sshll.u32 [#allocation11], 4
      %s91 = int_to_ptr.vmem [resolvable:$true] %s90
      %96 = dma.hbm_to_vmem [thread:$0]  %s7, 256, %s91, [#allocation12], 64, 64, 4
    $region33: #{tpu_custom_call.1} parent=1 // pred_fallthru
      _
    // Predicated region
    $region34: #{tpu_custom_call.1} parent=1 // pred_check
      _
    $region35: #{tpu_custom_call.1} parent=1 // pred_check_branch
      %98 = sbr.rel (0) target = $region37
    $region36: #{tpu_custom_call.1} parent=1 // pred_region
      _
    $region37: #{tpu_custom_call.1} parent=1 // pred_fallthru
      _
    // Predicated region
    $region38: #{tpu_custom_call.1} parent=1 // pred_check
      _
    $region39: #{tpu_custom_call.1} parent=1 // pred_check_branch
      %100 = sbr.rel (0) target = $region41
    $region40: #{tpu_custom_call.1} parent=1 // pred_region
      %s102 = ssub.s32 512, 512
      %103 = vsyncadd [#allocation12], %s102
      %s104 = sshll.u32 [#allocation13], 4
      %s105 = int_to_ptr.vmem [resolvable:$true] %s104
      %110 = dma.hbm_to_vmem [thread:$0]  %s9, 512, %s105, [#allocation12], 64, 64, 4
    $region41: #{tpu_custom_call.1} parent=1 // pred_fallthru
      _
    // Predicated region
    $region42: #{tpu_custom_call.1} parent=1 // pred_check
      _
    $region43: #{tpu_custom_call.1} parent=1 // pred_check_branch
      %112 = sbr.rel (0) target = $region45
    $region44: #{tpu_custom_call.1} parent=1 // pred_region
      _
    $region45: #{tpu_custom_call.1} parent=1 // pred_fallthru
      _
    // Predicated region
    $region46: #{tpu_custom_call.1} parent=1 // pred_check
      _
    $region47: #{tpu_custom_call.1} parent=1 // pred_check_branch
      %114 = sbr.rel (0) target = $region49
    $region48: #{tpu_custom_call.1} parent=1 // pred_region
      %115 = dma.done [#allocation3], 1024
    $region49: #{tpu_custom_call.1} parent=1 // pred_fallthru
      _
    // Predicated region
    $region50: #{tpu_custom_call.1} parent=1 // pred_check
      _
    $region51: #{tpu_custom_call.1} parent=1 // pred_check_branch
      %117 = sbr.rel (0) target = $region53
    $region52: #{tpu_custom_call.1} parent=1 // pred_region
      %118 = dma.done [#allocation6], 256
    $region53: #{tpu_custom_call.1} parent=1 // pred_fallthru
      _
    // Predicated region
    $region54: #{tpu_custom_call.1} parent=1 // pred_check
      _
    $region55: #{tpu_custom_call.1} parent=1 // pred_check_branch
      %120 = sbr.rel (0) target = $region57
    $region56: #{tpu_custom_call.1} parent=1 // pred_region
      %121 = dma.done [#allocation6], 256
    $region57: #{tpu_custom_call.1} parent=1 // pred_fallthru
      _
    // Predicated region
    $region58: #{tpu_custom_call.1} parent=1 // pred_check
      _
    $region59: #{tpu_custom_call.1} parent=1 // pred_check_branch
      %123 = sbr.rel (0) target = $region61
    $region60: #{tpu_custom_call.1} parent=1 // pred_region
      %124 = dma.done [#allocation9], 256
    $region61: #{tpu_custom_call.1} parent=1 // pred_fallthru
      _
    // Predicated region
    $region62: #{tpu_custom_call.1} parent=1 // pred_check
      _
    $region63: #{tpu_custom_call.1} parent=1 // pred_check_branch
      %126 = sbr.rel (0) target = $region65
    $region64: #{tpu_custom_call.1} parent=1 // pred_region
      %127 = dma.done [#allocation9], 256
    $region65: #{tpu_custom_call.1} parent=1 // pred_fallthru
      _
    // Predicated region
    $region66: #{tpu_custom_call.1} parent=1 // pred_check
      _
    $region67: #{tpu_custom_call.1} parent=1 // pred_check_branch
      %129 = sbr.rel (0) target = $region69
    $region68: #{tpu_custom_call.1} parent=1 // pred_region
      %130 = dma.done [#allocation12], 256
    $region69: #{tpu_custom_call.1} parent=1 // pred_fallthru
      _
    // Predicated region
    $region70: #{tpu_custom_call.1} parent=1 // pred_check
      _
    $region71: #{tpu_custom_call.1} parent=1 // pred_check_branch
      %132 = sbr.rel (0) target = $region73
    $region72: #{tpu_custom_call.1} parent=1 // pred_region
      %133 = dma.done [#allocation12], 512
    $region73: #{tpu_custom_call.1} parent=1 // pred_fallthru
      _
    %v135 = vld [vmem:[#allocation2] sm:$0xff]
    %v136 = vld [vmem:[#allocation2 + $0x8] sm:$0xff]
    %v137 = vld [vmem:[#allocation2 + $0x10] sm:$0xff]
    %v138 = vld [vmem:[#allocation2 + $0x18] sm:$0xff]
    %v139 = vld [vmem:[#allocation2 + $0x20] sm:$0xff]
    %v140 = vld [vmem:[#allocation2 + $0x28] sm:$0xff]
    %v141 = vld [vmem:[#allocation2 + $0x30] sm:$0xff]
    %v142 = vld [vmem:[#allocation2 + $0x38] sm:$0xff]
    %v143 = vld [vmem:[#allocation5] sm:$0xf]
    %v144 = vld [vmem:[#allocation5 + $0x4] sm:$0xf]
    %v145 = vld [vmem:[#allocation5 + $0x8] sm:$0xf]
    %v146 = vld [vmem:[#allocation5 + $0xc] sm:$0xf]
    %v147 = vpack.c.bf16 %v136, %v135
    %v148 = vpack.c.bf16 %v138, %v137
    %v149 = vpack.c.bf16 %v140, %v139
    %v150 = vpack.c.bf16 %v142, %v141
    %v151 = vld [vmem:[%s2] sm:$0x1]
    %v153 = vlaneseq
    %v154 = vshrl.u32 %v153, 7
    %v155 = vsub.s32 0, %v154
    %v156 = vrot.slane %v151, %v155
    %v162 = vunpack.c.l.b16 %v143
    %v163 = vunpack.c.l.b16 %v144
    %v164 = vunpack.c.l.b16 %v145
    %v165 = vunpack.c.l.b16 %v146
    %v166 = vpack.c.b16 %v163, %v162
    %v167 = vpack.c.b16 %v165, %v164
    %vm170 = vcmask 261120
    %v172 = vsel %vm170, %v147, 0
    %v175 = vsel %vm170, %v148, 0
    %v178 = vsel %vm170, %v149, 0
    %v181 = vsel %vm170, %v150, 0
    %183 = vmatprep.subr.bf16.mxu0 0
    %184 = vmatpush1.bf16.msra.mxu0 0
    %185 = vmatprep.subr.bf16.mxu0 0
    %186 = vmatpush1.bf16.msra.mxu0 0
    %187 = vmatprep.subr.bf16.mxu0 0
    %188 = vmatpush1.bf16.msra.mxu0 0
    %189 = vmatprep.subr.bf16.mxu0 0
    %190 = vmatpush1.bf16.msra.mxu0 0
    %191 = vmatprep.subr.bf16.mxu0 0
    %192 = vmatpush1.bf16.msra.mxu0 0
    %193 = vmatprep.subr.bf16.mxu0 0
    %194 = vmatpush1.bf16.msra.mxu0 0
    %195 = vmatprep.subr.bf16.mxu0 0
    %196 = vmatpush1.bf16.msra.mxu0 %v167
    %197 = vmatprep.subr.bf16.mxu0 0
    %198 = vmatpush1.bf16.msra.mxu0 %v166
    %199 = vmatprep.subr.bf16.mxu0 0
    %200 = vmatpush2.bf16.msra.mxu0 0
    %201 = vmatprep.subr.bf16.mxu0 0
    %202 = vmatpush2.bf16.msra.mxu0 0
    %203 = vmatprep.subr.bf16.mxu0 0
    %204 = vmatpush2.bf16.msra.mxu0 0
    %205 = vmatprep.subr.bf16.mxu0 0
    %206 = vmatpush2.bf16.msra.mxu0 0
    %207 = vmatprep.subr.bf16.mxu0 0
    %208 = vmatpush2.bf16.msra.mxu0 0
    %209 = vmatprep.subr.bf16.mxu0 0
    %210 = vmatpush2.bf16.msra.mxu0 0
    %211 = vmatprep.subr.bf16.mxu0 0
    %212 = vmatpush2.bf16.msra.mxu0 0
    %213 = vmatprep.subr.bf16.mxu0 0
    %214 = vmatpush2.bf16.msra.mxu0 0
    %215 = vmatprep.mubr.bf16.mxu0 0
    %216 = vmatmul.mubr.bf16.gmra.mxu0 %v172
    %v217 = vpop.f32.mrf.mxu0
    %v218 = vadd.f32 %v156, %v217
    %v219 = vpop.f32.mrf.mxu0
    %v220 = vpop.f32.mrf.mxu0
    %v221 = vadd.f32 %v156, %v220
    %v222 = vpop.f32.mrf.mxu0
    %223 = vmatprep.mubr.bf16.mxu0 0
    %224 = vmatmul.mubr.bf16.gmra.mxu0 %v175
    %v225 = vpop.f32.mrf.mxu0
    %v226 = vadd.f32 %v156, %v225
    %v227 = vpop.f32.mrf.mxu0
    %v228 = vpop.f32.mrf.mxu0
    %v229 = vadd.f32 %v156, %v228
    %v230 = vpop.f32.mrf.mxu0
    %231 = vmatprep.mubr.bf16.mxu0 0
    %232 = vmatmul.mubr.bf16.gmra.mxu0 %v178
    %v233 = vpop.f32.mrf.mxu0
    %v234 = vadd.f32 %v156, %v233
    %v235 = vpop.f32.mrf.mxu0
    %v236 = vpop.f32.mrf.mxu0
    %v237 = vadd.f32 %v156, %v236
    %v238 = vpop.f32.mrf.mxu0
    %239 = vmatprep.mubr.bf16.mxu0 0
    %240 = vmatmul.mubr.bf16.gmra.mxu0 %v181
    %v241 = vpop.f32.mrf.mxu0
    %v242 = vadd.f32 %v156, %v241
    %v243 = vpop.f32.mrf.mxu0
    %v244 = vpop.f32.mrf.mxu0
    %v245 = vadd.f32 %v156, %v244
    %v246 = vpop.f32.mrf.mxu0
    %247 = vdwg.mxu0
    %v248 = vld [vmem:[#allocation7] sm:$0xf]
    %v249 = vld [vmem:[#allocation7 + $0x4] sm:$0xf]
    %v250 = vld [vmem:[#allocation7 + $0x8] sm:$0xf]
    %v251 = vld [vmem:[#allocation7 + $0xc] sm:$0xf]
    %v252 = vld [vmem:[#allocation8] sm:$0xf]
    %v253 = vld [vmem:[#allocation8 + $0x4] sm:$0xf]
    %v254 = vld [vmem:[#allocation8 + $0x8] sm:$0xf]
    %v255 = vld [vmem:[#allocation8 + $0xc] sm:$0xf]
    %v256 = vld [vmem:[#allocation10] sm:$0xf]
    %v257 = vld [vmem:[#allocation10 + $0x4] sm:$0xf]
    %v258 = vld [vmem:[#allocation10 + $0x8] sm:$0xf]
    %v259 = vld [vmem:[#allocation10 + $0xc] sm:$0xf]
    %v260 = vld [vmem:[%s6] sm:$0x1]
    %v262 = vlaneseq
    %v263 = vshrl.u32 %v262, 7
    %v264 = vsub.s32 0, %v263
    %v265 = vrot.slane %v260, %v264
    %v271 = vunpack.c.l.b16 %v248
    %v272 = vunpack.c.l.b16 %v249
    %v273 = vunpack.c.l.b16 %v250
    %v274 = vunpack.c.l.b16 %v251
    %v275 = vpack.c.b16 %v272, %v271
    %v276 = vpack.c.b16 %v274, %v273
    %v280 = vsel %vm170, 0, 0
    %282 = vmatprep.subr.bf16.mxu0 0
    %283 = vmatpush1.bf16.msra.mxu0 0
    %284 = vmatprep.subr.bf16.mxu0 0
    %285 = vmatpush1.bf16.msra.mxu0 0
    %286 = vmatprep.subr.bf16.mxu0 0
    %287 = vmatpush1.bf16.msra.mxu0 0
    %288 = vmatprep.subr.bf16.mxu0 0
    %289 = vmatpush1.bf16.msra.mxu0 0
    %290 = vmatprep.subr.bf16.mxu0 0
    %291 = vmatpush1.bf16.msra.mxu0 0
    %292 = vmatprep.subr.bf16.mxu0 0
    %293 = vmatpush1.bf16.msra.mxu0 0
    %294 = vmatprep.subr.bf16.mxu0 0
    %295 = vmatpush1.bf16.msra.mxu0 %v276
    %296 = vmatprep.subr.bf16.mxu0 0
    %297 = vmatpush1.bf16.msra.mxu0 %v275
    %298 = vmatprep.subr.bf16.mxu0 0
    %299 = vmatpush2.bf16.msra.mxu0 0
    %300 = vmatprep.subr.bf16.mxu0 0
    %301 = vmatpush2.bf16.msra.mxu0 0
    %302 = vmatprep.subr.bf16.mxu0 0
    %303 = vmatpush2.bf16.msra.mxu0 0
    %304 = vmatprep.subr.bf16.mxu0 0
    %305 = vmatpush2.bf16.msra.mxu0 0
    %306 = vmatprep.subr.bf16.mxu0 0
    %307 = vmatpush2.bf16.msra.mxu0 0
    %308 = vmatprep.subr.bf16.mxu0 0
    %309 = vmatpush2.bf16.msra.mxu0 0
    %310 = vmatprep.subr.bf16.mxu0 0
    %311 = vmatpush2.bf16.msra.mxu0 0
    %312 = vmatprep.subr.bf16.mxu0 0
    %313 = vmatpush2.bf16.msra.mxu0 0
    %314 = vmatprep.mubr.bf16.mxu0 0
    %315 = vmatmul.mubr.bf16.gmra.mxu0 %v280
    %v316 = vpop.f32.mrf.mxu0
    %v317 = vadd.f32 0.0, %v316
    %v318 = vpop.f32.mrf.mxu0
    %v319 = vpop.f32.mrf.mxu0
    %v320 = vpop.f32.mrf.mxu0
    %321 = vdwg.mxu0
    %v322 = vadd.f32 %v218, %v317
    %v323 = vmul.f32 %v322, 0.5
    %v324 = vtanh.pop %v323
    %v325 = vadd.f32 %v324, 1.0
    %v326 = vmul.f32 %v325, 0.5
    %v327 = vtanh.pop %v322
    %v328 = vmul.f32 %v326, 0.0
    %330 = vrot.lane.b32.xlu0 %v327, 32
    %v331 = vpop.permute.xlu0 %330
    %v333 = vmul.f32 %v326, %v331
    %335 = vrot.lane.b32.xlu0 %v333, 32
    %v336 = vpop.permute.xlu0 %335
    %v338 = vadd.f32 %v328, %v336
    %v339 = vtanh.pop %v338
    %341 = vrot.lane.b32.xlu0 %v339, 32
    %v342 = vpop.permute.xlu0 %341
    %v344 = vmul.f32 %v326, %v342
    %v345 = vpack.c.bf16 %v344, %v344
    %v350 = vunpack.c.l.b16 %v256
    %v351 = vunpack.c.l.b16 %v257
    %v352 = vunpack.c.l.b16 %v258
    %v353 = vunpack.c.l.b16 %v259
    %v354 = vpack.c.b16 %v351, %v350
    %v355 = vpack.c.b16 %v353, %v352
    %358 = vmatprep.subr.bf16.mxu0 0
    %359 = vmatpush1.bf16.msra.mxu0 0
    %360 = vmatprep.subr.bf16.mxu0 0
    %361 = vmatpush1.bf16.msra.mxu0 0
    %362 = vmatprep.subr.bf16.mxu0 0
    %363 = vmatpush1.bf16.msra.mxu0 0
    %364 = vmatprep.subr.bf16.mxu0 0
    %365 = vmatpush1.bf16.msra.mxu0 0
    %366 = vmatprep.subr.bf16.mxu0 0
    %367 = vmatpush1.bf16.msra.mxu0 0
    %368 = vmatprep.subr.bf16.mxu0 0
    %369 = vmatpush1.bf16.msra.mxu0 0
    %370 = vmatprep.subr.bf16.mxu0 0
    %371 = vmatpush1.bf16.msra.mxu0 %v355
    %372 = vmatprep.subr.bf16.mxu0 0
    %373 = vmatpush1.bf16.msra.mxu0 %v354
    %374 = vmatprep.subr.bf16.mxu0 0
    %375 = vmatpush2.bf16.msra.mxu0 0
    %376 = vmatprep.subr.bf16.mxu0 0
    %377 = vmatpush2.bf16.msra.mxu0 0
    %378 = vmatprep.subr.bf16.mxu0 0
    %379 = vmatpush2.bf16.msra.mxu0 0
    %380 = vmatprep.subr.bf16.mxu0 0
    %381 = vmatpush2.bf16.msra.mxu0 0
    %382 = vmatprep.subr.bf16.mxu0 0
    %383 = vmatpush2.bf16.msra.mxu0 0
    %384 = vmatprep.subr.bf16.mxu0 0
    %385 = vmatpush2.bf16.msra.mxu0 0
    %386 = vmatprep.subr.bf16.mxu0 0
    %387 = vmatpush2.bf16.msra.mxu0 0
    %388 = vmatprep.subr.bf16.mxu0 0
    %389 = vmatpush2.bf16.msra.mxu0 0
    %390 = vmatprep.mubr.bf16.mxu0 0
    %391 = vmatmul.mubr.bf16.gmra.mxu0 %v280
    %v392 = vpop.f32.mrf.mxu0
    %v393 = vadd.f32 0.0, %v392
    %v394 = vpop.f32.mrf.mxu0
    %v395 = vpop.f32.mrf.mxu0
    %v396 = vpop.f32.mrf.mxu0
    %397 = vdwg.mxu0
    %399 = vrot.lane.b32.xlu0 %v345, 64
    %v400 = vpop.permute.xlu0 %399
    %v405 = vunpack.c.l.b16 %v252
    %v406 = vunpack.c.l.b16 %v253
    %v407 = vunpack.c.l.b16 %v254
    %v408 = vunpack.c.l.b16 %v255
    %v409 = vpack.c.b16 %v406, %v405
    %v410 = vpack.c.b16 %v408, %v407
    %v414 = vsel %vm170, %v400, 0
    %416 = vmatprep.subr.bf16.mxu0 0
    %417 = vmatpush1.bf16.msra.mxu0 0
    %418 = vmatprep.subr.bf16.mxu0 0
    %419 = vmatpush1.bf16.msra.mxu0 0
    %420 = vmatprep.subr.bf16.mxu0 0
    %421 = vmatpush1.bf16.msra.mxu0 0
    %422 = vmatprep.subr.bf16.mxu0 0
    %423 = vmatpush1.bf16.msra.mxu0 0
    %424 = vmatprep.subr.bf16.mxu0 0
    %425 = vmatpush1.bf16.msra.mxu0 0
    %426 = vmatprep.subr.bf16.mxu0 0
    %427 = vmatpush1.bf16.msra.mxu0 0
    %428 = vmatprep.subr.bf16.mxu0 0
    %429 = vmatpush1.bf16.msra.mxu0 %v410
    %430 = vmatprep.subr.bf16.mxu0 0
    %431 = vmatpush1.bf16.msra.mxu0 %v409
    %432 = vmatprep.subr.bf16.mxu0 0
    %433 = vmatpush2.bf16.msra.mxu0 0
    %434 = vmatprep.subr.bf16.mxu0 0
    %435 = vmatpush2.bf16.msra.mxu0 0
    %436 = vmatprep.subr.bf16.mxu0 0
    %437 = vmatpush2.bf16.msra.mxu0 0
    %438 = vmatprep.subr.bf16.mxu0 0
    %439 = vmatpush2.bf16.msra.mxu0 0
    %440 = vmatprep.subr.bf16.mxu0 0
    %441 = vmatpush2.bf16.msra.mxu0 0
    %442 = vmatprep.subr.bf16.mxu0 0
    %443 = vmatpush2.bf16.msra.mxu0 0
    %444 = vmatprep.subr.bf16.mxu0 0
    %445 = vmatpush2.bf16.msra.mxu0 0
    %446 = vmatprep.subr.bf16.mxu0 0
    %447 = vmatpush2.bf16.msra.mxu0 0
    %448 = vmatprep.mubr.bf16.mxu0 0
    %449 = vmatmul.mubr.bf16.gmra.mxu0 %v414
    %v450 = vpop.f32.mrf.mxu0
    %v451 = vadd.f32 %v393, %v450
    %v452 = vpop.f32.mrf.mxu0
    %v453 = vpop.f32.mrf.mxu0
    %v454 = vpop.f32.mrf.mxu0
    %455 = vdwg.mxu0
    %v456 = vadd.f32 %v451, %v265
    %v457 = vmul.f32 %v456, 0.5
    %v458 = vtanh.pop %v457
    %v459 = vadd.f32 %v458, 1.0
    %v460 = vmul.f32 %v459, 0.5
    %v461 = vtanh.pop %v456
    %v462 = vmul.f32 %v460, 0.0
    %464 = vrot.lane.b32.xlu0 %v461, 32
    %v465 = vpop.permute.xlu0 %464
    %v467 = vmul.f32 %v460, %v465
    %469 = vrot.lane.b32.xlu0 %v467, 32
    %v470 = vpop.permute.xlu0 %469
    %v472 = vadd.f32 %v462, %v470
    %v473 = vtanh.pop %v472
    %475 = vrot.lane.b32.xlu0 %v473, 32
    %v476 = vpop.permute.xlu0 %475
    %v478 = vmul.f32 %v460, %v476
    %479 = vmatprep.subr.bf16.mxu0 0
    %480 = vmatpush1.bf16.msra.mxu0 0
    %481 = vmatprep.subr.bf16.mxu0 0
    %482 = vmatpush1.bf16.msra.mxu0 0
    %483 = vmatprep.subr.bf16.mxu0 0
    %484 = vmatpush1.bf16.msra.mxu0 0
    %485 = vmatprep.subr.bf16.mxu0 0
    %486 = vmatpush1.bf16.msra.mxu0 0
    %487 = vmatprep.subr.bf16.mxu0 0
    %488 = vmatpush1.bf16.msra.mxu0 0
    %489 = vmatprep.subr.bf16.mxu0 0
    %490 = vmatpush1.bf16.msra.mxu0 0
    %491 = vmatprep.subr.bf16.mxu0 0
    %492 = vmatpush1.bf16.msra.mxu0 %v276
    %493 = vmatprep.subr.bf16.mxu0 0
    %494 = vmatpush1.bf16.msra.mxu0 %v275
    %495 = vmatprep.subr.bf16.mxu0 0
    %496 = vmatpush2.bf16.msra.mxu0 0
    %497 = vmatprep.subr.bf16.mxu0 0
    %498 = vmatpush2.bf16.msra.mxu0 0
    %499 = vmatprep.subr.bf16.mxu0 0
    %500 = vmatpush2.bf16.msra.mxu0 0
    %501 = vmatprep.subr.bf16.mxu0 0
    %502 = vmatpush2.bf16.msra.mxu0 0
    %503 = vmatprep.subr.bf16.mxu0 0
    %504 = vmatpush2.bf16.msra.mxu0 0
    %505 = vmatprep.subr.bf16.mxu0 0
    %506 = vmatpush2.bf16.msra.mxu0 0
    %507 = vmatprep.subr.bf16.mxu0 0
    %508 = vmatpush2.bf16.msra.mxu0 0
    %509 = vmatprep.subr.bf16.mxu0 0
    %510 = vmatpush2.bf16.msra.mxu0 0
    %511 = vmatprep.mubr.bf16.mxu0 0
    %512 = vmatmul.mubr.bf16.gmra.mxu0 %v414
    %v513 = vpop.f32.mrf.mxu0
    %v514 = vadd.f32 0.0, %v513
    %v515 = vpop.f32.mrf.mxu0
    %v516 = vpop.f32.mrf.mxu0
    %v517 = vpop.f32.mrf.mxu0
    %518 = vdwg.mxu0
    %v519 = vadd.f32 %v221, %v514
    %v520 = vmul.f32 %v519, 0.5
    %v521 = vtanh.pop %v520
    %v522 = vadd.f32 %v521, 1.0
    %v523 = vmul.f32 %v522, 0.5
    %v524 = vtanh.pop %v519
    %v525 = vmul.f32 %v523, %v338
    %527 = vrot.lane.b32.xlu0 %v524, 32
    %v528 = vpop.permute.xlu0 %527
    %v530 = vmul.f32 %v523, %v528
    %532 = vrot.lane.b32.xlu0 %v530, 32
    %v533 = vpop.permute.xlu0 %532
    %v535 = vadd.f32 %v525, %v533
    %v536 = vtanh.pop %v535
    %538 = vrot.lane.b32.xlu0 %v536, 32
    %v539 = vpop.permute.xlu0 %538
    %v541 = vmul.f32 %v523, %v539
    %v542 = vpack.c.bf16 %v541, %v541
    %v543 = vpack.c.bf16 %v478, %v478
    %545 = vrot.lane.b32.xlu0 %v543, 64
    %v546 = vpop.permute.xlu0 %545
    %v548 = vsel %vm170, %v546, 0
    %550 = vmatprep.subr.bf16.mxu0 0
    %551 = vmatpush1.bf16.msra.mxu0 0
    %552 = vmatprep.subr.bf16.mxu0 0
    %553 = vmatpush1.bf16.msra.mxu0 0
    %554 = vmatprep.subr.bf16.mxu0 0
    %555 = vmatpush1.bf16.msra.mxu0 0
    %556 = vmatprep.subr.bf16.mxu0 0
    %557 = vmatpush1.bf16.msra.mxu0 0
    %558 = vmatprep.subr.bf16.mxu0 0
    %559 = vmatpush1.bf16.msra.mxu0 0
    %560 = vmatprep.subr.bf16.mxu0 0
    %561 = vmatpush1.bf16.msra.mxu0 0
    %562 = vmatprep.subr.bf16.mxu0 0
    %563 = vmatpush1.bf16.msra.mxu0 %v355
    %564 = vmatprep.subr.bf16.mxu0 0
    %565 = vmatpush1.bf16.msra.mxu0 %v354
    %566 = vmatprep.subr.bf16.mxu0 0
    %567 = vmatpush2.bf16.msra.mxu0 0
    %568 = vmatprep.subr.bf16.mxu0 0
    %569 = vmatpush2.bf16.msra.mxu0 0
    %570 = vmatprep.subr.bf16.mxu0 0
    %571 = vmatpush2.bf16.msra.mxu0 0
    %572 = vmatprep.subr.bf16.mxu0 0
    %573 = vmatpush2.bf16.msra.mxu0 0
    %574 = vmatprep.subr.bf16.mxu0 0
    %575 = vmatpush2.bf16.msra.mxu0 0
    %576 = vmatprep.subr.bf16.mxu0 0
    %577 = vmatpush2.bf16.msra.mxu0 0
    %578 = vmatprep.subr.bf16.mxu0 0
    %579 = vmatpush2.bf16.msra.mxu0 0
    %580 = vmatprep.subr.bf16.mxu0 0
    %581 = vmatpush2.bf16.msra.mxu0 0
    %582 = vmatprep.mubr.bf16.mxu0 0
    %583 = vmatmul.mubr.bf16.gmra.mxu0 %v548
    %v584 = vpop.f32.mrf.mxu0
    %v585 = vadd.f32 0.0, %v584
    %v586 = vpop.f32.mrf.mxu0
    %v587 = vpop.f32.mrf.mxu0
    %v588 = vpop.f32.mrf.mxu0
    %589 = vdwg.mxu0
    %591 = vrot.lane.b32.xlu0 %v542, 64
    %v592 = vpop.permute.xlu0 %591
    %v594 = vsel %vm170, %v592, 0
    %596 = vmatprep.subr.bf16.mxu0 0
    %597 = vmatpush1.bf16.msra.mxu0 0
    %598 = vmatprep.subr.bf16.mxu0 0
    %599 = vmatpush1.bf16.msra.mxu0 0
    %600 = vmatprep.subr.bf16.mxu0 0
    %601 = vmatpush1.bf16.msra.mxu0 0
    %602 = vmatprep.subr.bf16.mxu0 0
    %603 = vmatpush1.bf16.msra.mxu0 0
    %604 = vmatprep.subr.bf16.mxu0 0
    %605 = vmatpush1.bf16.msra.mxu0 0
    %606 = vmatprep.subr.bf16.mxu0 0
    %607 = vmatpush1.bf16.msra.mxu0 0
    %608 = vmatprep.subr.bf16.mxu0 0
    %609 = vmatpush1.bf16.msra.mxu0 %v410
    %610 = vmatprep.subr.bf16.mxu0 0
    %611 = vmatpush1.bf16.msra.mxu0 %v409
    %612 = vmatprep.subr.bf16.mxu0 0
    %613 = vmatpush2.bf16.msra.mxu0 0
    %614 = vmatprep.subr.bf16.mxu0 0
    %615 = vmatpush2.bf16.msra.mxu0 0
    %616 = vmatprep.subr.bf16.mxu0 0
    %617 = vmatpush2.bf16.msra.mxu0 0
    %618 = vmatprep.subr.bf16.mxu0 0
    %619 = vmatpush2.bf16.msra.mxu0 0
    %620 = vmatprep.subr.bf16.mxu0 0
    %621 = vmatpush2.bf16.msra.mxu0 0
    %622 = vmatprep.subr.bf16.mxu0 0
    %623 = vmatpush2.bf16.msra.mxu0 0
    %624 = vmatprep.subr.bf16.mxu0 0
    %625 = vmatpush2.bf16.msra.mxu0 0
    %626 = vmatprep.subr.bf16.mxu0 0
    %627 = vmatpush2.bf16.msra.mxu0 0
    %628 = vmatprep.mubr.bf16.mxu0 0
    %629 = vmatmul.mubr.bf16.gmra.mxu0 %v594
    %v630 = vpop.f32.mrf.mxu0
    %v631 = vadd.f32 %v585, %v630
    %v632 = vpop.f32.mrf.mxu0
    %v633 = vpop.f32.mrf.mxu0
    %v634 = vpop.f32.mrf.mxu0
    %635 = vdwg.mxu0
    %v636 = vadd.f32 %v631, %v265
    %v637 = vmul.f32 %v636, 0.5
    %v638 = vtanh.pop %v637
    %v639 = vadd.f32 %v638, 1.0
    %v640 = vmul.f32 %v639, 0.5
    %v641 = vtanh.pop %v636
    %v642 = vmul.f32 %v640, %v472
    %644 = vrot.lane.b32.xlu0 %v641, 32
    %v645 = vpop.permute.xlu0 %644
    %v647 = vmul.f32 %v640, %v645
    %649 = vrot.lane.b32.xlu0 %v647, 32
    %v650 = vpop.permute.xlu0 %649
    %v652 = vadd.f32 %v642, %v650
    %v653 = vtanh.pop %v652
    %655 = vrot.lane.b32.xlu0 %v653, 32
    %v656 = vpop.permute.xlu0 %655
    %v658 = vmul.f32 %v640, %v656
    %659 = vmatprep.subr.bf16.mxu0 0
    %660 = vmatpush1.bf16.msra.mxu0 0
    %661 = vmatprep.subr.bf16.mxu0 0
    %662 = vmatpush1.bf16.msra.mxu0 0
    %663 = vmatprep.subr.bf16.mxu0 0
    %664 = vmatpush1.bf16.msra.mxu0 0
    %665 = vmatprep.subr.bf16.mxu0 0
    %666 = vmatpush1.bf16.msra.mxu0 0
    %667 = vmatprep.subr.bf16.mxu0 0
    %668 = vmatpush1.bf16.msra.mxu0 0
    %669 = vmatprep.subr.bf16.mxu0 0
    %670 = vmatpush1.bf16.msra.mxu0 0
    %671 = vmatprep.subr.bf16.mxu0 0
    %672 = vmatpush1.bf16.msra.mxu0 %v276
    %673 = vmatprep.subr.bf16.mxu0 0
    %674 = vmatpush1.bf16.msra.mxu0 %v275
    %675 = vmatprep.subr.bf16.mxu0 0
    %676 = vmatpush2.bf16.msra.mxu0 0
    %677 = vmatprep.subr.bf16.mxu0 0
    %678 = vmatpush2.bf16.msra.mxu0 0
    %679 = vmatprep.subr.bf16.mxu0 0
    %680 = vmatpush2.bf16.msra.mxu0 0
    %681 = vmatprep.subr.bf16.mxu0 0
    %682 = vmatpush2.bf16.msra.mxu0 0
    %683 = vmatprep.subr.bf16.mxu0 0
    %684 = vmatpush2.bf16.msra.mxu0 0
    %685 = vmatprep.subr.bf16.mxu0 0
    %686 = vmatpush2.bf16.msra.mxu0 0
    %687 = vmatprep.subr.bf16.mxu0 0
    %688 = vmatpush2.bf16.msra.mxu0 0
    %689 = vmatprep.subr.bf16.mxu0 0
    %690 = vmatpush2.bf16.msra.mxu0 0
    %691 = vmatprep.mubr.bf16.mxu0 0
    %692 = vmatmul.mubr.bf16.gmra.mxu0 %v594
    %v693 = vpop.f32.mrf.mxu0
    %v694 = vadd.f32 0.0, %v693
    %v695 = vpop.f32.mrf.mxu0
    %v696 = vpop.f32.mrf.mxu0
    %v697 = vpop.f32.mrf.mxu0
    %698 = vdwg.mxu0
    %v699 = vadd.f32 %v226, %v694
    %v700 = vmul.f32 %v699, 0.5
    %v701 = vtanh.pop %v700
    %v702 = vadd.f32 %v701, 1.0
    %v703 = vmul.f32 %v702, 0.5
    %v704 = vtanh.pop %v699
    %v705 = vmul.f32 %v703, %v535
    %707 = vrot.lane.b32.xlu0 %v704, 32
    %v708 = vpop.permute.xlu0 %707
    %v710 = vmul.f32 %v703, %v708
    %712 = vrot.lane.b32.xlu0 %v710, 32
    %v713 = vpop.permute.xlu0 %712
    %v715 = vadd.f32 %v705, %v713
    %v716 = vtanh.pop %v715
    %718 = vrot.lane.b32.xlu0 %v716, 32
    %v719 = vpop.permute.xlu0 %718
    %v721 = vmul.f32 %v703, %v719
    %v722 = vpack.c.bf16 %v721, %v721
    %v723 = vpack.c.bf16 %v658, %v658
    %725 = vrot.lane.b32.xlu0 %v723, 64
    %v726 = vpop.permute.xlu0 %725
    %v728 = vsel %vm170, %v726, 0
    %730 = vmatprep.subr.bf16.mxu0 0
    %731 = vmatpush1.bf16.msra.mxu0 0
    %732 = vmatprep.subr.bf16.mxu0 0
    %733 = vmatpush1.bf16.msra.mxu0 0
    %734 = vmatprep.subr.bf16.mxu0 0
    %735 = vmatpush1.bf16.msra.mxu0 0
    %736 = vmatprep.subr.bf16.mxu0 0
    %737 = vmatpush1.bf16.msra.mxu0 0
    %738 = vmatprep.subr.bf16.mxu0 0
    %739 = vmatpush1.bf16.msra.mxu0 0
    %740 = vmatprep.subr.bf16.mxu0 0
    %741 = vmatpush1.bf16.msra.mxu0 0
    %742 = vmatprep.subr.bf16.mxu0 0
    %743 = vmatpush1.bf16.msra.mxu0 %v355
    %744 = vmatprep.subr.bf16.mxu0 0
    %745 = vmatpush1.bf16.msra.mxu0 %v354
    %746 = vmatprep.subr.bf16.mxu0 0
    %747 = vmatpush2.bf16.msra.mxu0 0
    %748 = vmatprep.subr.bf16.mxu0 0
    %749 = vmatpush2.bf16.msra.mxu0 0
    %750 = vmatprep.subr.bf16.mxu0 0
    %751 = vmatpush2.bf16.msra.mxu0 0
    %752 = vmatprep.subr.bf16.mxu0 0
    %753 = vmatpush2.bf16.msra.mxu0 0
    %754 = vmatprep.subr.bf16.mxu0 0
    %755 = vmatpush2.bf16.msra.mxu0 0
    %756 = vmatprep.subr.bf16.mxu0 0
    %757 = vmatpush2.bf16.msra.mxu0 0
    %758 = vmatprep.subr.bf16.mxu0 0
    %759 = vmatpush2.bf16.msra.mxu0 0
    %760 = vmatprep.subr.bf16.mxu0 0
    %761 = vmatpush2.bf16.msra.mxu0 0
    %762 = vmatprep.mubr.bf16.mxu0 0
    %763 = vmatmul.mubr.bf16.gmra.mxu0 %v728
    %v764 = vpop.f32.mrf.mxu0
    %v765 = vadd.f32 0.0, %v764
    %v766 = vpop.f32.mrf.mxu0
    %v767 = vpop.f32.mrf.mxu0
    %v768 = vpop.f32.mrf.mxu0
    %769 = vdwg.mxu0
    %771 = vrot.lane.b32.xlu0 %v722, 64
    %v772 = vpop.permute.xlu0 %771
    %v774 = vsel %vm170, %v772, 0
    %776 = vmatprep.subr.bf16.mxu0 0
    %777 = vmatpush1.bf16.msra.mxu0 0
    %778 = vmatprep.subr.bf16.mxu0 0
    %779 = vmatpush1.bf16.msra.mxu0 0
    %780 = vmatprep.subr.bf16.mxu0 0
    %781 = vmatpush1.bf16.msra.mxu0 0
    %782 = vmatprep.subr.bf16.mxu0 0
    %783 = vmatpush1.bf16.msra.mxu0 0
    %784 = vmatprep.subr.bf16.mxu0 0
    %785 = vmatpush1.bf16.msra.mxu0 0
    %786 = vmatprep.subr.bf16.mxu0 0
    %787 = vmatpush1.bf16.msra.mxu0 0
    %788 = vmatprep.subr.bf16.mxu0 0
    %789 = vmatpush1.bf16.msra.mxu0 %v410
    %790 = vmatprep.subr.bf16.mxu0 0
    %791 = vmatpush1.bf16.msra.mxu0 %v409
    %792 = vmatprep.subr.bf16.mxu0 0
    %793 = vmatpush2.bf16.msra.mxu0 0
    %794 = vmatprep.subr.bf16.mxu0 0
    %795 = vmatpush2.bf16.msra.mxu0 0
    %796 = vmatprep.subr.bf16.mxu0 0
    %797 = vmatpush2.bf16.msra.mxu0 0
    %798 = vmatprep.subr.bf16.mxu0 0
    %799 = vmatpush2.bf16.msra.mxu0 0
    %800 = vmatprep.subr.bf16.mxu0 0
    %801 = vmatpush2.bf16.msra.mxu0 0
    %802 = vmatprep.subr.bf16.mxu0 0
    %803 = vmatpush2.bf16.msra.mxu0 0
    %804 = vmatprep.subr.bf16.mxu0 0
    %805 = vmatpush2.bf16.msra.mxu0 0
    %806 = vmatprep.subr.bf16.mxu0 0
    %807 = vmatpush2.bf16.msra.mxu0 0
    %808 = vmatprep.mubr.bf16.mxu0 0
    %809 = vmatmul.mubr.bf16.gmra.mxu0 %v774
    %v810 = vpop.f32.mrf.mxu0
    %v811 = vadd.f32 %v765, %v810
    %v812 = vpop.f32.mrf.mxu0
    %v813 = vpop.f32.mrf.mxu0
    %v814 = vpop.f32.mrf.mxu0
    %815 = vdwg.mxu0
    %v816 = vadd.f32 %v811, %v265
    %v817 = vmul.f32 %v816, 0.5
    %v818 = vtanh.pop %v817
    %v819 = vadd.f32 %v818, 1.0
    %v820 = vmul.f32 %v819, 0.5
    %v821 = vtanh.pop %v816
    %v822 = vmul.f32 %v820, %v652
    %824 = vrot.lane.b32.xlu0 %v821, 32
    %v825 = vpop.permute.xlu0 %824
    %v827 = vmul.f32 %v820, %v825
    %829 = vrot.lane.b32.xlu0 %v827, 32
    %v830 = vpop.permute.xlu0 %829
    %v832 = vadd.f32 %v822, %v830
    %v833 = vtanh.pop %v832
    %835 = vrot.lane.b32.xlu0 %v833, 32
    %v836 = vpop.permute.xlu0 %835
    %v838 = vmul.f32 %v820, %v836
    %839 = vmatprep.subr.bf16.mxu0 0
    %840 = vmatpush1.bf16.msra.mxu0 0
    %841 = vmatprep.subr.bf16.mxu0 0
    %842 = vmatpush1.bf16.msra.mxu0 0
    %843 = vmatprep.subr.bf16.mxu0 0
    %844 = vmatpush1.bf16.msra.mxu0 0
    %845 = vmatprep.subr.bf16.mxu0 0
    %846 = vmatpush1.bf16.msra.mxu0 0
    %847 = vmatprep.subr.bf16.mxu0 0
    %848 = vmatpush1.bf16.msra.mxu0 0
    %849 = vmatprep.subr.bf16.mxu0 0
    %850 = vmatpush1.bf16.msra.mxu0 0
    %851 = vmatprep.subr.bf16.mxu0 0
    %852 = vmatpush1.bf16.msra.mxu0 %v276
    %853 = vmatprep.subr.bf16.mxu0 0
    %854 = vmatpush1.bf16.msra.mxu0 %v275
    %855 = vmatprep.subr.bf16.mxu0 0
    %856 = vmatpush2.bf16.msra.mxu0 0
    %857 = vmatprep.subr.bf16.mxu0 0
    %858 = vmatpush2.bf16.msra.mxu0 0
    %859 = vmatprep.subr.bf16.mxu0 0
    %860 = vmatpush2.bf16.msra.mxu0 0
    %861 = vmatprep.subr.bf16.mxu0 0
    %862 = vmatpush2.bf16.msra.mxu0 0
    %863 = vmatprep.subr.bf16.mxu0 0
    %864 = vmatpush2.bf16.msra.mxu0 0
    %865 = vmatprep.subr.bf16.mxu0 0
    %866 = vmatpush2.bf16.msra.mxu0 0
    %867 = vmatprep.subr.bf16.mxu0 0
    %868 = vmatpush2.bf16.msra.mxu0 0
    %869 = vmatprep.subr.bf16.mxu0 0
    %870 = vmatpush2.bf16.msra.mxu0 0
    %871 = vmatprep.mubr.bf16.mxu0 0
    %872 = vmatmul.mubr.bf16.gmra.mxu0 %v774
    %v873 = vpop.f32.mrf.mxu0
    %v874 = vadd.f32 0.0, %v873
    %v875 = vpop.f32.mrf.mxu0
    %v876 = vpop.f32.mrf.mxu0
    %v877 = vpop.f32.mrf.mxu0
    %878 = vdwg.mxu0
    %v879 = vadd.f32 %v229, %v874
    %v880 = vmul.f32 %v879, 0.5
    %v881 = vtanh.pop %v880
    %v882 = vadd.f32 %v881, 1.0
    %v883 = vmul.f32 %v882, 0.5
    %v884 = vtanh.pop %v879
    %v885 = vmul.f32 %v883, %v715
    %887 = vrot.lane.b32.xlu0 %v884, 32
    %v888 = vpop.permute.xlu0 %887
    %v890 = vmul.f32 %v883, %v888
    %892 = vrot.lane.b32.xlu0 %v890, 32
    %v893 = vpop.permute.xlu0 %892
    %v895 = vadd.f32 %v885, %v893
    %v896 = vtanh.pop %v895
    %898 = vrot.lane.b32.xlu0 %v896, 32
    %v899 = vpop.permute.xlu0 %898
    %v901 = vmul.f32 %v883, %v899
    %v902 = vpack.c.bf16 %v901, %v901
    %v903 = vpack.c.bf16 %v838, %v838
    %905 = vrot.lane.b32.xlu0 %v903, 64
    %v906 = vpop.permute.xlu0 %905
    %v908 = vsel %vm170, %v906, 0
    %910 = vmatprep.subr.bf16.mxu0 0
    %911 = vmatpush1.bf16.msra.mxu0 0
    %912 = vmatprep.subr.bf16.mxu0 0
    %913 = vmatpush1.bf16.msra.mxu0 0
    %914 = vmatprep.subr.bf16.mxu0 0
    %915 = vmatpush1.bf16.msra.mxu0 0
    %916 = vmatprep.subr.bf16.mxu0 0
    %917 = vmatpush1.bf16.msra.mxu0 0
    %918 = vmatprep.subr.bf16.mxu0 0
    %919 = vmatpush1.bf16.msra.mxu0 0
    %920 = vmatprep.subr.bf16.mxu0 0
    %921 = vmatpush1.bf16.msra.mxu0 0
    %922 = vmatprep.subr.bf16.mxu0 0
    %923 = vmatpush1.bf16.msra.mxu0 %v355
    %924 = vmatprep.subr.bf16.mxu0 0
    %925 = vmatpush1.bf16.msra.mxu0 %v354
    %926 = vmatprep.subr.bf16.mxu0 0
    %927 = vmatpush2.bf16.msra.mxu0 0
    %928 = vmatprep.subr.bf16.mxu0 0
    %929 = vmatpush2.bf16.msra.mxu0 0
    %930 = vmatprep.subr.bf16.mxu0 0
    %931 = vmatpush2.bf16.msra.mxu0 0
    %932 = vmatprep.subr.bf16.mxu0 0
    %933 = vmatpush2.bf16.msra.mxu0 0
    %934 = vmatprep.subr.bf16.mxu0 0
    %935 = vmatpush2.bf16.msra.mxu0 0
    %936 = vmatprep.subr.bf16.mxu0 0
    %937 = vmatpush2.bf16.msra.mxu0 0
    %938 = vmatprep.subr.bf16.mxu0 0
    %939 = vmatpush2.bf16.msra.mxu0 0
    %940 = vmatprep.subr.bf16.mxu0 0
    %941 = vmatpush2.bf16.msra.mxu0 0
    %942 = vmatprep.mubr.bf16.mxu0 0
    %943 = vmatmul.mubr.bf16.gmra.mxu0 %v908
    %v944 = vpop.f32.mrf.mxu0
    %v945 = vadd.f32 0.0, %v944
    %v946 = vpop.f32.mrf.mxu0
    %v947 = vpop.f32.mrf.mxu0
    %v948 = vpop.f32.mrf.mxu0
    %949 = vdwg.mxu0
    %951 = vrot.lane.b32.xlu0 %v902, 64
    %v952 = vpop.permute.xlu0 %951
    %v954 = vsel %vm170, %v952, 0
    %956 = vmatprep.subr.bf16.mxu0 0
    %957 = vmatpush1.bf16.msra.mxu0 0
    %958 = vmatprep.subr.bf16.mxu0 0
    %959 = vmatpush1.bf16.msra.mxu0 0
    %960 = vmatprep.subr.bf16.mxu0 0
    %961 = vmatpush1.bf16.msra.mxu0 0
    %962 = vmatprep.subr.bf16.mxu0 0
    %963 = vmatpush1.bf16.msra.mxu0 0
    %964 = vmatprep.subr.bf16.mxu0 0
    %965 = vmatpush1.bf16.msra.mxu0 0
    %966 = vmatprep.subr.bf16.mxu0 0
    %967 = vmatpush1.bf16.msra.mxu0 0
    %968 = vmatprep.subr.bf16.mxu0 0
    %969 = vmatpush1.bf16.msra.mxu0 %v410
    %970 = vmatprep.subr.bf16.mxu0 0
    %971 = vmatpush1.bf16.msra.mxu0 %v409
    %972 = vmatprep.subr.bf16.mxu0 0
    %973 = vmatpush2.bf16.msra.mxu0 0
    %974 = vmatprep.subr.bf16.mxu0 0
    %975 = vmatpush2.bf16.msra.mxu0 0
    %976 = vmatprep.subr.bf16.mxu0 0
    %977 = vmatpush2.bf16.msra.mxu0 0
    %978 = vmatprep.subr.bf16.mxu0 0
    %979 = vmatpush2.bf16.msra.mxu0 0
    %980 = vmatprep.subr.bf16.mxu0 0
    %981 = vmatpush2.bf16.msra.mxu0 0
    %982 = vmatprep.subr.bf16.mxu0 0
    %983 = vmatpush2.bf16.msra.mxu0 0
    %984 = vmatprep.subr.bf16.mxu0 0
    %985 = vmatpush2.bf16.msra.mxu0 0
    %986 = vmatprep.subr.bf16.mxu0 0
    %987 = vmatpush2.bf16.msra.mxu0 0
    %988 = vmatprep.mubr.bf16.mxu0 0
    %989 = vmatmul.mubr.bf16.gmra.mxu0 %v954
    %v990 = vpop.f32.mrf.mxu0
    %v991 = vadd.f32 %v945, %v990
    %v992 = vpop.f32.mrf.mxu0
    %v993 = vpop.f32.mrf.mxu0
    %v994 = vpop.f32.mrf.mxu0
    %995 = vdwg.mxu0
    %v996 = vadd.f32 %v991, %v265
    %v997 = vmul.f32 %v996, 0.5
    %v998 = vtanh.pop %v997
    %v999 = vadd.f32 %v998, 1.0
    %v1000 = vmul.f32 %v999, 0.5
    %v1001 = vtanh.pop %v996
    %v1002 = vmul.f32 %v1000, %v832
    %1004 = vrot.lane.b32.xlu0 %v1001, 32
    %v1005 = vpop.permute.xlu0 %1004
    %v1007 = vmul.f32 %v1000, %v1005
    %1009 = vrot.lane.b32.xlu0 %v1007, 32
    %v1010 = vpop.permute.xlu0 %1009
    %v1012 = vadd.f32 %v1002, %v1010
    %v1013 = vtanh.pop %v1012
    %1015 = vrot.lane.b32.xlu0 %v1013, 32
    %v1016 = vpop.permute.xlu0 %1015
    %v1018 = vmul.f32 %v1000, %v1016
    %1019 = vmatprep.subr.bf16.mxu0 0
    %1020 = vmatpush1.bf16.msra.mxu0 0
    %1021 = vmatprep.subr.bf16.mxu0 0
    %1022 = vmatpush1.bf16.msra.mxu0 0
    %1023 = vmatprep.subr.bf16.mxu0 0
    %1024 = vmatpush1.bf16.msra.mxu0 0
    %1025 = vmatprep.subr.bf16.mxu0 0
    %1026 = vmatpush1.bf16.msra.mxu0 0
    %1027 = vmatprep.subr.bf16.mxu0 0
    %1028 = vmatpush1.bf16.msra.mxu0 0
    %1029 = vmatprep.subr.bf16.mxu0 0
    %1030 = vmatpush1.bf16.msra.mxu0 0
    %1031 = vmatprep.subr.bf16.mxu0 0
    %1032 = vmatpush1.bf16.msra.mxu0 %v276
    %1033 = vmatprep.subr.bf16.mxu0 0
    %1034 = vmatpush1.bf16.msra.mxu0 %v275
    %1035 = vmatprep.subr.bf16.mxu0 0
    %1036 = vmatpush2.bf16.msra.mxu0 0
    %1037 = vmatprep.subr.bf16.mxu0 0
    %1038 = vmatpush2.bf16.msra.mxu0 0
    %1039 = vmatprep.subr.bf16.mxu0 0
    %1040 = vmatpush2.bf16.msra.mxu0 0
    %1041 = vmatprep.subr.bf16.mxu0 0
    %1042 = vmatpush2.bf16.msra.mxu0 0
    %1043 = vmatprep.subr.bf16.mxu0 0
    %1044 = vmatpush2.bf16.msra.mxu0 0
    %1045 = vmatprep.subr.bf16.mxu0 0
    %1046 = vmatpush2.bf16.msra.mxu0 0
    %1047 = vmatprep.subr.bf16.mxu0 0
    %1048 = vmatpush2.bf16.msra.mxu0 0
    %1049 = vmatprep.subr.bf16.mxu0 0
    %1050 = vmatpush2.bf16.msra.mxu0 0
    %1051 = vmatprep.mubr.bf16.mxu0 0
    %1052 = vmatmul.mubr.bf16.gmra.mxu0 %v954
    %v1053 = vpop.f32.mrf.mxu0
    %v1054 = vadd.f32 0.0, %v1053
    %v1055 = vpop.f32.mrf.mxu0
    %v1056 = vpop.f32.mrf.mxu0
    %v1057 = vpop.f32.mrf.mxu0
    %1058 = vdwg.mxu0
    %v1059 = vadd.f32 %v234, %v1054
    %v1060 = vmul.f32 %v1059, 0.5
    %v1061 = vtanh.pop %v1060
    %v1062 = vadd.f32 %v1061, 1.0
    %v1063 = vmul.f32 %v1062, 0.5
    %v1064 = vtanh.pop %v1059
    %v1065 = vmul.f32 %v1063, %v895
    %1067 = vrot.lane.b32.xlu0 %v1064, 32
    %v1068 = vpop.permute.xlu0 %1067
    %v1070 = vmul.f32 %v1063, %v1068
    %1072 = vrot.lane.b32.xlu0 %v1070, 32
    %v1073 = vpop.permute.xlu0 %1072
    %v1075 = vadd.f32 %v1065, %v1073
    %v1076 = vtanh.pop %v1075
    %1078 = vrot.lane.b32.xlu0 %v1076, 32
    %v1079 = vpop.permute.xlu0 %1078
    %v1081 = vmul.f32 %v1063, %v1079
    %v1082 = vpack.c.bf16 %v1081, %v1081
    %v1083 = vpack.c.bf16 %v1018, %v1018
    %1085 = vrot.lane.b32.xlu0 %v1083, 64
    %v1086 = vpop.permute.xlu0 %1085
    %v1088 = vsel %vm170, %v1086, 0
    %1090 = vmatprep.subr.bf16.mxu0 0
    %1091 = vmatpush1.bf16.msra.mxu0 0
    %1092 = vmatprep.subr.bf16.mxu0 0
    %1093 = vmatpush1.bf16.msra.mxu0 0
    %1094 = vmatprep.subr.bf16.mxu0 0
    %1095 = vmatpush1.bf16.msra.mxu0 0
    %1096 = vmatprep.subr.bf16.mxu0 0
    %1097 = vmatpush1.bf16.msra.mxu0 0
    %1098 = vmatprep.subr.bf16.mxu0 0
    %1099 = vmatpush1.bf16.msra.mxu0 0
    %1100 = vmatprep.subr.bf16.mxu0 0
    %1101 = vmatpush1.bf16.msra.mxu0 0
    %1102 = vmatprep.subr.bf16.mxu0 0
    %1103 = vmatpush1.bf16.msra.mxu0 %v355
    %1104 = vmatprep.subr.bf16.mxu0 0
    %1105 = vmatpush1.bf16.msra.mxu0 %v354
    %1106 = vmatprep.subr.bf16.mxu0 0
    %1107 = vmatpush2.bf16.msra.mxu0 0
    %1108 = vmatprep.subr.bf16.mxu0 0
    %1109 = vmatpush2.bf16.msra.mxu0 0
    %1110 = vmatprep.subr.bf16.mxu0 0
    %1111 = vmatpush2.bf16.msra.mxu0 0
    %1112 = vmatprep.subr.bf16.mxu0 0
    %1113 = vmatpush2.bf16.msra.mxu0 0
    %1114 = vmatprep.subr.bf16.mxu0 0
    %1115 = vmatpush2.bf16.msra.mxu0 0
    %1116 = vmatprep.subr.bf16.mxu0 0
    %1117 = vmatpush2.bf16.msra.mxu0 0
    %1118 = vmatprep.subr.bf16.mxu0 0
    %1119 = vmatpush2.bf16.msra.mxu0 0
    %1120 = vmatprep.subr.bf16.mxu0 0
    %1121 = vmatpush2.bf16.msra.mxu0 0
    %1122 = vmatprep.mubr.bf16.mxu0 0
    %1123 = vmatmul.mubr.bf16.gmra.mxu0 %v1088
    %v1124 = vpop.f32.mrf.mxu0
    %v1125 = vadd.f32 0.0, %v1124
    %v1126 = vpop.f32.mrf.mxu0
    %v1127 = vpop.f32.mrf.mxu0
    %v1128 = vpop.f32.mrf.mxu0
    %1129 = vdwg.mxu0
    %1131 = vrot.lane.b32.xlu0 %v1082, 64
    %v1132 = vpop.permute.xlu0 %1131
    %v1134 = vsel %vm170, %v1132, 0
    %1136 = vmatprep.subr.bf16.mxu0 0
    %1137 = vmatpush1.bf16.msra.mxu0 0
    %1138 = vmatprep.subr.bf16.mxu0 0
    %1139 = vmatpush1.bf16.msra.mxu0 0
    %1140 = vmatprep.subr.bf16.mxu0 0
    %1141 = vmatpush1.bf16.msra.mxu0 0
    %1142 = vmatprep.subr.bf16.mxu0 0
    %1143 = vmatpush1.bf16.msra.mxu0 0
    %1144 = vmatprep.subr.bf16.mxu0 0
    %1145 = vmatpush1.bf16.msra.mxu0 0
    %1146 = vmatprep.subr.bf16.mxu0 0
    %1147 = vmatpush1.bf16.msra.mxu0 0
    %1148 = vmatprep.subr.bf16.mxu0 0
    %1149 = vmatpush1.bf16.msra.mxu0 %v410
    %1150 = vmatprep.subr.bf16.mxu0 0
    %1151 = vmatpush1.bf16.msra.mxu0 %v409
    %1152 = vmatprep.subr.bf16.mxu0 0
    %1153 = vmatpush2.bf16.msra.mxu0 0
    %1154 = vmatprep.subr.bf16.mxu0 0
    %1155 = vmatpush2.bf16.msra.mxu0 0
    %1156 = vmatprep.subr.bf16.mxu0 0
    %1157 = vmatpush2.bf16.msra.mxu0 0
    %1158 = vmatprep.subr.bf16.mxu0 0
    %1159 = vmatpush2.bf16.msra.mxu0 0
    %1160 = vmatprep.subr.bf16.mxu0 0
    %1161 = vmatpush2.bf16.msra.mxu0 0
    %1162 = vmatprep.subr.bf16.mxu0 0
    %1163 = vmatpush2.bf16.msra.mxu0 0
    %1164 = vmatprep.subr.bf16.mxu0 0
    %1165 = vmatpush2.bf16.msra.mxu0 0
    %1166 = vmatprep.subr.bf16.mxu0 0
    %1167 = vmatpush2.bf16.msra.mxu0 0
    %1168 = vmatprep.mubr.bf16.mxu0 0
    %1169 = vmatmul.mubr.bf16.gmra.mxu0 %v1134
    %v1170 = vpop.f32.mrf.mxu0
    %v1171 = vadd.f32 %v1125, %v1170
    %v1172 = vpop.f32.mrf.mxu0
    %v1173 = vpop.f32.mrf.mxu0
    %v1174 = vpop.f32.mrf.mxu0
    %1175 = vdwg.mxu0
    %v1176 = vadd.f32 %v1171, %v265
    %v1177 = vmul.f32 %v1176, 0.5
    %v1178 = vtanh.pop %v1177
    %v1179 = vadd.f32 %v1178, 1.0
    %v1180 = vmul.f32 %v1179, 0.5
    %v1181 = vtanh.pop %v1176
    %v1182 = vmul.f32 %v1180, %v1012
    %1184 = vrot.lane.b32.xlu0 %v1181, 32
    %v1185 = vpop.permute.xlu0 %1184
    %v1187 = vmul.f32 %v1180, %v1185
    %1189 = vrot.lane.b32.xlu0 %v1187, 32
    %v1190 = vpop.permute.xlu0 %1189
    %v1192 = vadd.f32 %v1182, %v1190
    %v1193 = vtanh.pop %v1192
    %1195 = vrot.lane.b32.xlu0 %v1193, 32
    %v1196 = vpop.permute.xlu0 %1195
    %v1198 = vmul.f32 %v1180, %v1196
    %1199 = vmatprep.subr.bf16.mxu0 0
    %1200 = vmatpush1.bf16.msra.mxu0 0
    %1201 = vmatprep.subr.bf16.mxu0 0
    %1202 = vmatpush1.bf16.msra.mxu0 0
    %1203 = vmatprep.subr.bf16.mxu0 0
    %1204 = vmatpush1.bf16.msra.mxu0 0
    %1205 = vmatprep.subr.bf16.mxu0 0
    %1206 = vmatpush1.bf16.msra.mxu0 0
    %1207 = vmatprep.subr.bf16.mxu0 0
    %1208 = vmatpush1.bf16.msra.mxu0 0
    %1209 = vmatprep.subr.bf16.mxu0 0
    %1210 = vmatpush1.bf16.msra.mxu0 0
    %1211 = vmatprep.subr.bf16.mxu0 0
    %1212 = vmatpush1.bf16.msra.mxu0 %v276
    %1213 = vmatprep.subr.bf16.mxu0 0
    %1214 = vmatpush1.bf16.msra.mxu0 %v275
    %1215 = vmatprep.subr.bf16.mxu0 0
    %1216 = vmatpush2.bf16.msra.mxu0 0
    %1217 = vmatprep.subr.bf16.mxu0 0
    %1218 = vmatpush2.bf16.msra.mxu0 0
    %1219 = vmatprep.subr.bf16.mxu0 0
    %1220 = vmatpush2.bf16.msra.mxu0 0
    %1221 = vmatprep.subr.bf16.mxu0 0
    %1222 = vmatpush2.bf16.msra.mxu0 0
    %1223 = vmatprep.subr.bf16.mxu0 0
    %1224 = vmatpush2.bf16.msra.mxu0 0
    %1225 = vmatprep.subr.bf16.mxu0 0
    %1226 = vmatpush2.bf16.msra.mxu0 0
    %1227 = vmatprep.subr.bf16.mxu0 0
    %1228 = vmatpush2.bf16.msra.mxu0 0
    %1229 = vmatprep.subr.bf16.mxu0 0
    %1230 = vmatpush2.bf16.msra.mxu0 0
    %1231 = vmatprep.mubr.bf16.mxu0 0
    %1232 = vmatmul.mubr.bf16.gmra.mxu0 %v1134
    %v1233 = vpop.f32.mrf.mxu0
    %v1234 = vadd.f32 0.0, %v1233
    %v1235 = vpop.f32.mrf.mxu0
    %v1236 = vpop.f32.mrf.mxu0
    %v1237 = vpop.f32.mrf.mxu0
    %1238 = vdwg.mxu0
    %v1239 = vadd.f32 %v237, %v1234
    %v1240 = vmul.f32 %v1239, 0.5
    %v1241 = vtanh.pop %v1240
    %v1242 = vadd.f32 %v1241, 1.0
    %v1243 = vmul.f32 %v1242, 0.5
    %v1244 = vtanh.pop %v1239
    %v1245 = vmul.f32 %v1243, %v1075
    %1247 = vrot.lane.b32.xlu0 %v1244, 32
    %v1248 = vpop.permute.xlu0 %1247
    %v1250 = vmul.f32 %v1243, %v1248
    %1252 = vrot.lane.b32.xlu0 %v1250, 32
    %v1253 = vpop.permute.xlu0 %1252
    %v1255 = vadd.f32 %v1245, %v1253
    %v1256 = vtanh.pop %v1255
    %1258 = vrot.lane.b32.xlu0 %v1256, 32
    %v1259 = vpop.permute.xlu0 %1258
    %v1261 = vmul.f32 %v1243, %v1259
    %v1262 = vpack.c.bf16 %v1261, %v1261
    %v1263 = vpack.c.bf16 %v1198, %v1198
    %1265 = vrot.lane.b32.xlu0 %v1263, 64
    %v1266 = vpop.permute.xlu0 %1265
    %v1268 = vsel %vm170, %v1266, 0
    %1270 = vmatprep.subr.bf16.mxu0 0
    %1271 = vmatpush1.bf16.msra.mxu0 0
    %1272 = vmatprep.subr.bf16.mxu0 0
    %1273 = vmatpush1.bf16.msra.mxu0 0
    %1274 = vmatprep.subr.bf16.mxu0 0
    %1275 = vmatpush1.bf16.msra.mxu0 0
    %1276 = vmatprep.subr.bf16.mxu0 0
    %1277 = vmatpush1.bf16.msra.mxu0 0
    %1278 = vmatprep.subr.bf16.mxu0 0
    %1279 = vmatpush1.bf16.msra.mxu0 0
    %1280 = vmatprep.subr.bf16.mxu0 0
    %1281 = vmatpush1.bf16.msra.mxu0 0
    %1282 = vmatprep.subr.bf16.mxu0 0
    %1283 = vmatpush1.bf16.msra.mxu0 %v355
    %1284 = vmatprep.subr.bf16.mxu0 0
    %1285 = vmatpush1.bf16.msra.mxu0 %v354
    %1286 = vmatprep.subr.bf16.mxu0 0
    %1287 = vmatpush2.bf16.msra.mxu0 0
    %1288 = vmatprep.subr.bf16.mxu0 0
    %1289 = vmatpush2.bf16.msra.mxu0 0
    %1290 = vmatprep.subr.bf16.mxu0 0
    %1291 = vmatpush2.bf16.msra.mxu0 0
    %1292 = vmatprep.subr.bf16.mxu0 0
    %1293 = vmatpush2.bf16.msra.mxu0 0
    %1294 = vmatprep.subr.bf16.mxu0 0
    %1295 = vmatpush2.bf16.msra.mxu0 0
    %1296 = vmatprep.subr.bf16.mxu0 0
    %1297 = vmatpush2.bf16.msra.mxu0 0
    %1298 = vmatprep.subr.bf16.mxu0 0
    %1299 = vmatpush2.bf16.msra.mxu0 0
    %1300 = vmatprep.subr.bf16.mxu0 0
    %1301 = vmatpush2.bf16.msra.mxu0 0
    %1302 = vmatprep.mubr.bf16.mxu0 0
    %1303 = vmatmul.mubr.bf16.gmra.mxu0 %v1268
    %v1304 = vpop.f32.mrf.mxu0
    %v1305 = vadd.f32 0.0, %v1304
    %v1306 = vpop.f32.mrf.mxu0
    %v1307 = vpop.f32.mrf.mxu0
    %v1308 = vpop.f32.mrf.mxu0
    %1309 = vdwg.mxu0
    %1311 = vrot.lane.b32.xlu0 %v1262, 64
    %v1312 = vpop.permute.xlu0 %1311
    %v1314 = vsel %vm170, %v1312, 0
    %1316 = vmatprep.subr.bf16.mxu0 0
    %1317 = vmatpush1.bf16.msra.mxu0 0
    %1318 = vmatprep.subr.bf16.mxu0 0
    %1319 = vmatpush1.bf16.msra.mxu0 0
    %1320 = vmatprep.subr.bf16.mxu0 0
    %1321 = vmatpush1.bf16.msra.mxu0 0
    %1322 = vmatprep.subr.bf16.mxu0 0
    %1323 = vmatpush1.bf16.msra.mxu0 0
    %1324 = vmatprep.subr.bf16.mxu0 0
    %1325 = vmatpush1.bf16.msra.mxu0 0
    %1326 = vmatprep.subr.bf16.mxu0 0
    %1327 = vmatpush1.bf16.msra.mxu0 0
    %1328 = vmatprep.subr.bf16.mxu0 0
    %1329 = vmatpush1.bf16.msra.mxu0 %v410
    %1330 = vmatprep.subr.bf16.mxu0 0
    %1331 = vmatpush1.bf16.msra.mxu0 %v409
    %1332 = vmatprep.subr.bf16.mxu0 0
    %1333 = vmatpush2.bf16.msra.mxu0 0
    %1334 = vmatprep.subr.bf16.mxu0 0
    %1335 = vmatpush2.bf16.msra.mxu0 0
    %1336 = vmatprep.subr.bf16.mxu0 0
    %1337 = vmatpush2.bf16.msra.mxu0 0
    %1338 = vmatprep.subr.bf16.mxu0 0
    %1339 = vmatpush2.bf16.msra.mxu0 0
    %1340 = vmatprep.subr.bf16.mxu0 0
    %1341 = vmatpush2.bf16.msra.mxu0 0
    %1342 = vmatprep.subr.bf16.mxu0 0
    %1343 = vmatpush2.bf16.msra.mxu0 0
    %1344 = vmatprep.subr.bf16.mxu0 0
    %1345 = vmatpush2.bf16.msra.mxu0 0
    %1346 = vmatprep.subr.bf16.mxu0 0
    %1347 = vmatpush2.bf16.msra.mxu0 0
    %1348 = vmatprep.mubr.bf16.mxu0 0
    %1349 = vmatmul.mubr.bf16.gmra.mxu0 %v1314
    %v1350 = vpop.f32.mrf.mxu0
    %v1351 = vadd.f32 %v1305, %v1350
    %v1352 = vpop.f32.mrf.mxu0
    %v1353 = vpop.f32.mrf.mxu0
    %v1354 = vpop.f32.mrf.mxu0
    %1355 = vdwg.mxu0
    %v1356 = vadd.f32 %v1351, %v265
    %v1357 = vmul.f32 %v1356, 0.5
    %v1358 = vtanh.pop %v1357
    %v1359 = vadd.f32 %v1358, 1.0
    %v1360 = vmul.f32 %v1359, 0.5
    %v1361 = vtanh.pop %v1356
    %v1362 = vmul.f32 %v1360, %v1192
    %1364 = vrot.lane.b32.xlu0 %v1361, 32
    %v1365 = vpop.permute.xlu0 %1364
    %v1367 = vmul.f32 %v1360, %v1365
    %1369 = vrot.lane.b32.xlu0 %v1367, 32
    %v1370 = vpop.permute.xlu0 %1369
    %v1372 = vadd.f32 %v1362, %v1370
    %v1373 = vtanh.pop %v1372
    %1375 = vrot.lane.b32.xlu0 %v1373, 32
    %v1376 = vpop.permute.xlu0 %1375
    %v1378 = vmul.f32 %v1360, %v1376
    %1379 = vmatprep.subr.bf16.mxu0 0
    %1380 = vmatpush1.bf16.msra.mxu0 0
    %1381 = vmatprep.subr.bf16.mxu0 0
    %1382 = vmatpush1.bf16.msra.mxu0 0
    %1383 = vmatprep.subr.bf16.mxu0 0
    %1384 = vmatpush1.bf16.msra.mxu0 0
    %1385 = vmatprep.subr.bf16.mxu0 0
    %1386 = vmatpush1.bf16.msra.mxu0 0
    %1387 = vmatprep.subr.bf16.mxu0 0
    %1388 = vmatpush1.bf16.msra.mxu0 0
    %1389 = vmatprep.subr.bf16.mxu0 0
    %1390 = vmatpush1.bf16.msra.mxu0 0
    %1391 = vmatprep.subr.bf16.mxu0 0
    %1392 = vmatpush1.bf16.msra.mxu0 %v276
    %1393 = vmatprep.subr.bf16.mxu0 0
    %1394 = vmatpush1.bf16.msra.mxu0 %v275
    %1395 = vmatprep.subr.bf16.mxu0 0
    %1396 = vmatpush2.bf16.msra.mxu0 0
    %1397 = vmatprep.subr.bf16.mxu0 0
    %1398 = vmatpush2.bf16.msra.mxu0 0
    %1399 = vmatprep.subr.bf16.mxu0 0
    %1400 = vmatpush2.bf16.msra.mxu0 0
    %1401 = vmatprep.subr.bf16.mxu0 0
    %1402 = vmatpush2.bf16.msra.mxu0 0
    %1403 = vmatprep.subr.bf16.mxu0 0
    %1404 = vmatpush2.bf16.msra.mxu0 0
    %1405 = vmatprep.subr.bf16.mxu0 0
    %1406 = vmatpush2.bf16.msra.mxu0 0
    %1407 = vmatprep.subr.bf16.mxu0 0
    %1408 = vmatpush2.bf16.msra.mxu0 0
    %1409 = vmatprep.subr.bf16.mxu0 0
    %1410 = vmatpush2.bf16.msra.mxu0 0
    %1411 = vmatprep.mubr.bf16.mxu0 0
    %1412 = vmatmul.mubr.bf16.gmra.mxu0 %v1314
    %v1413 = vpop.f32.mrf.mxu0
    %v1414 = vadd.f32 0.0, %v1413
    %v1415 = vpop.f32.mrf.mxu0
    %v1416 = vpop.f32.mrf.mxu0
    %v1417 = vpop.f32.mrf.mxu0
    %1418 = vdwg.mxu0
    %v1419 = vadd.f32 %v242, %v1414
    %v1420 = vmul.f32 %v1419, 0.5
    %v1421 = vtanh.pop %v1420
    %v1422 = vadd.f32 %v1421, 1.0
    %v1423 = vmul.f32 %v1422, 0.5
    %v1424 = vtanh.pop %v1419
    %v1425 = vmul.f32 %v1423, %v1255
    %1427 = vrot.lane.b32.xlu0 %v1424, 32
    %v1428 = vpop.permute.xlu0 %1427
    %v1430 = vmul.f32 %v1423, %v1428
    %1432 = vrot.lane.b32.xlu0 %v1430, 32
    %v1433 = vpop.permute.xlu0 %1432
    %v1435 = vadd.f32 %v1425, %v1433
    %v1436 = vtanh.pop %v1435
    %1438 = vrot.lane.b32.xlu0 %v1436, 32
    %v1439 = vpop.permute.xlu0 %1438
    %v1441 = vmul.f32 %v1423, %v1439
    %v1442 = vpack.c.bf16 %v1441, %v1441
    %v1443 = vpack.c.bf16 %v1378, %v1378
    %1445 = vrot.lane.b32.xlu0 %v1443, 64
    %v1446 = vpop.permute.xlu0 %1445
    %v1448 = vsel %vm170, %v1446, 0
    %1450 = vmatprep.subr.bf16.mxu0 0
    %1451 = vmatpush1.bf16.msra.mxu0 0
    %1452 = vmatprep.subr.bf16.mxu0 0
    %1453 = vmatpush1.bf16.msra.mxu0 0
    %1454 = vmatprep.subr.bf16.mxu0 0
    %1455 = vmatpush1.bf16.msra.mxu0 0
    %1456 = vmatprep.subr.bf16.mxu0 0
    %1457 = vmatpush1.bf16.msra.mxu0 0
    %1458 = vmatprep.subr.bf16.mxu0 0
    %1459 = vmatpush1.bf16.msra.mxu0 0
    %1460 = vmatprep.subr.bf16.mxu0 0
    %1461 = vmatpush1.bf16.msra.mxu0 0
    %1462 = vmatprep.subr.bf16.mxu0 0
    %1463 = vmatpush1.bf16.msra.mxu0 %v355
    %1464 = vmatprep.subr.bf16.mxu0 0
    %1465 = vmatpush1.bf16.msra.mxu0 %v354
    %1466 = vmatprep.subr.bf16.mxu0 0
    %1467 = vmatpush2.bf16.msra.mxu0 0
    %1468 = vmatprep.subr.bf16.mxu0 0
    %1469 = vmatpush2.bf16.msra.mxu0 0
    %1470 = vmatprep.subr.bf16.mxu0 0
    %1471 = vmatpush2.bf16.msra.mxu0 0
    %1472 = vmatprep.subr.bf16.mxu0 0
    %1473 = vmatpush2.bf16.msra.mxu0 0
    %1474 = vmatprep.subr.bf16.mxu0 0
    %1475 = vmatpush2.bf16.msra.mxu0 0
    %1476 = vmatprep.subr.bf16.mxu0 0
    %1477 = vmatpush2.bf16.msra.mxu0 0
    %1478 = vmatprep.subr.bf16.mxu0 0
    %1479 = vmatpush2.bf16.msra.mxu0 0
    %1480 = vmatprep.subr.bf16.mxu0 0
    %1481 = vmatpush2.bf16.msra.mxu0 0
    %1482 = vmatprep.mubr.bf16.mxu0 0
    %1483 = vmatmul.mubr.bf16.gmra.mxu0 %v1448
    %v1484 = vpop.f32.mrf.mxu0
    %v1485 = vadd.f32 0.0, %v1484
    %v1486 = vpop.f32.mrf.mxu0
    %v1487 = vpop.f32.mrf.mxu0
    %v1488 = vpop.f32.mrf.mxu0
    %1489 = vdwg.mxu0
    %1491 = vrot.lane.b32.xlu0 %v1442, 64
    %v1492 = vpop.permute.xlu0 %1491
    %v1494 = vsel %vm170, %v1492, 0
    %1496 = vmatprep.subr.bf16.mxu0 0
    %1497 = vmatpush1.bf16.msra.mxu0 0
    %1498 = vmatprep.subr.bf16.mxu0 0
    %1499 = vmatpush1.bf16.msra.mxu0 0
    %1500 = vmatprep.subr.bf16.mxu0 0
    %1501 = vmatpush1.bf16.msra.mxu0 0
    %1502 = vmatprep.subr.bf16.mxu0 0
    %1503 = vmatpush1.bf16.msra.mxu0 0
    %1504 = vmatprep.subr.bf16.mxu0 0
    %1505 = vmatpush1.bf16.msra.mxu0 0
    %1506 = vmatprep.subr.bf16.mxu0 0
    %1507 = vmatpush1.bf16.msra.mxu0 0
    %1508 = vmatprep.subr.bf16.mxu0 0
    %1509 = vmatpush1.bf16.msra.mxu0 %v410
    %1510 = vmatprep.subr.bf16.mxu0 0
    %1511 = vmatpush1.bf16.msra.mxu0 %v409
    %1512 = vmatprep.subr.bf16.mxu0 0
    %1513 = vmatpush2.bf16.msra.mxu0 0
    %1514 = vmatprep.subr.bf16.mxu0 0
    %1515 = vmatpush2.bf16.msra.mxu0 0
    %1516 = vmatprep.subr.bf16.mxu0 0
    %1517 = vmatpush2.bf16.msra.mxu0 0
    %1518 = vmatprep.subr.bf16.mxu0 0
    %1519 = vmatpush2.bf16.msra.mxu0 0
    %1520 = vmatprep.subr.bf16.mxu0 0
    %1521 = vmatpush2.bf16.msra.mxu0 0
    %1522 = vmatprep.subr.bf16.mxu0 0
    %1523 = vmatpush2.bf16.msra.mxu0 0
    %1524 = vmatprep.subr.bf16.mxu0 0
    %1525 = vmatpush2.bf16.msra.mxu0 0
    %1526 = vmatprep.subr.bf16.mxu0 0
    %1527 = vmatpush2.bf16.msra.mxu0 0
    %1528 = vmatprep.mubr.bf16.mxu0 0
    %1529 = vmatmul.mubr.bf16.gmra.mxu0 %v1494
    %v1530 = vpop.f32.mrf.mxu0
    %v1531 = vadd.f32 %v1485, %v1530
    %v1532 = vpop.f32.mrf.mxu0
    %v1533 = vpop.f32.mrf.mxu0
    %v1534 = vpop.f32.mrf.mxu0
    %1535 = vdwg.mxu0
    %v1536 = vadd.f32 %v1531, %v265
    %v1537 = vmul.f32 %v1536, 0.5
    %v1538 = vtanh.pop %v1537
    %v1539 = vadd.f32 %v1538, 1.0
    %v1540 = vmul.f32 %v1539, 0.5
    %v1541 = vtanh.pop %v1536
    %v1542 = vmul.f32 %v1540, %v1372
    %1544 = vrot.lane.b32.xlu0 %v1541, 32
    %v1545 = vpop.permute.xlu0 %1544
    %v1547 = vmul.f32 %v1540, %v1545
    %1549 = vrot.lane.b32.xlu0 %v1547, 32
    %v1550 = vpop.permute.xlu0 %1549
    %v1552 = vadd.f32 %v1542, %v1550
    %v1553 = vtanh.pop %v1552
    %1555 = vrot.lane.b32.xlu0 %v1553, 32
    %v1556 = vpop.permute.xlu0 %1555
    %v1558 = vmul.f32 %v1540, %v1556
    %1559 = vmatprep.subr.bf16.mxu0 0
    %1560 = vmatpush1.bf16.msra.mxu0 0
    %1561 = vmatprep.subr.bf16.mxu0 0
    %1562 = vmatpush1.bf16.msra.mxu0 0
    %1563 = vmatprep.subr.bf16.mxu0 0
    %1564 = vmatpush1.bf16.msra.mxu0 0
    %1565 = vmatprep.subr.bf16.mxu0 0
    %1566 = vmatpush1.bf16.msra.mxu0 0
    %1567 = vmatprep.subr.bf16.mxu0 0
    %1568 = vmatpush1.bf16.msra.mxu0 0
    %1569 = vmatprep.subr.bf16.mxu0 0
    %1570 = vmatpush1.bf16.msra.mxu0 0
    %1571 = vmatprep.subr.bf16.mxu0 0
    %1572 = vmatpush1.bf16.msra.mxu0 %v276
    %1573 = vmatprep.subr.bf16.mxu0 0
    %1574 = vmatpush1.bf16.msra.mxu0 %v275
    %1575 = vmatprep.subr.bf16.mxu0 0
    %1576 = vmatpush2.bf16.msra.mxu0 0
    %1577 = vmatprep.subr.bf16.mxu0 0
    %1578 = vmatpush2.bf16.msra.mxu0 0
    %1579 = vmatprep.subr.bf16.mxu0 0
    %1580 = vmatpush2.bf16.msra.mxu0 0
    %1581 = vmatprep.subr.bf16.mxu0 0
    %1582 = vmatpush2.bf16.msra.mxu0 0
    %1583 = vmatprep.subr.bf16.mxu0 0
    %1584 = vmatpush2.bf16.msra.mxu0 0
    %1585 = vmatprep.subr.bf16.mxu0 0
    %1586 = vmatpush2.bf16.msra.mxu0 0
    %1587 = vmatprep.subr.bf16.mxu0 0
    %1588 = vmatpush2.bf16.msra.mxu0 0
    %1589 = vmatprep.subr.bf16.mxu0 0
    %1590 = vmatpush2.bf16.msra.mxu0 0
    %1591 = vmatprep.mubr.bf16.mxu0 0
    %1592 = vmatmul.mubr.bf16.gmra.mxu0 %v1494
    %v1593 = vpop.f32.mrf.mxu0
    %v1594 = vadd.f32 0.0, %v1593
    %v1595 = vpop.f32.mrf.mxu0
    %v1596 = vpop.f32.mrf.mxu0
    %v1597 = vpop.f32.mrf.mxu0
    %1598 = vdwg.mxu0
    %v1599 = vadd.f32 %v245, %v1594
    %v1600 = vmul.f32 %v1599, 0.5
    %v1601 = vtanh.pop %v1600
    %v1602 = vadd.f32 %v1601, 1.0
    %v1603 = vmul.f32 %v1602, 0.5
    %v1604 = vtanh.pop %v1599
    %v1605 = vmul.f32 %v1603, %v1435
    %1607 = vrot.lane.b32.xlu0 %v1604, 32
    %v1608 = vpop.permute.xlu0 %1607
    %v1610 = vmul.f32 %v1603, %v1608
    %1612 = vrot.lane.b32.xlu0 %v1610, 32
    %v1613 = vpop.permute.xlu0 %1612
    %v1615 = vadd.f32 %v1605, %v1613
    %v1616 = vtanh.pop %v1615
    %1618 = vrot.lane.b32.xlu0 %v1616, 32
    %v1619 = vpop.permute.xlu0 %1618
    %v1621 = vmul.f32 %v1603, %v1619
    %v1622 = vpack.c.bf16 %v1621, %v1621
    %v1623 = vpack.c.bf16 %v1558, %v1558
    %1625 = vrot.lane.b32.xlu0 %v1623, 64
    %v1626 = vpop.permute.xlu0 %1625
    %v1628 = vsel %vm170, %v1626, 0
    %1630 = vmatprep.subr.bf16.mxu0 0
    %1631 = vmatpush1.bf16.msra.mxu0 0
    %1632 = vmatprep.subr.bf16.mxu0 0
    %1633 = vmatpush1.bf16.msra.mxu0 0
    %1634 = vmatprep.subr.bf16.mxu0 0
    %1635 = vmatpush1.bf16.msra.mxu0 0
    %1636 = vmatprep.subr.bf16.mxu0 0
    %1637 = vmatpush1.bf16.msra.mxu0 0
    %1638 = vmatprep.subr.bf16.mxu0 0
    %1639 = vmatpush1.bf16.msra.mxu0 0
    %1640 = vmatprep.subr.bf16.mxu0 0
    %1641 = vmatpush1.bf16.msra.mxu0 0
    %1642 = vmatprep.subr.bf16.mxu0 0
    %1643 = vmatpush1.bf16.msra.mxu0 %v355
    %1644 = vmatprep.subr.bf16.mxu0 0
    %1645 = vmatpush1.bf16.msra.mxu0 %v354
    %1646 = vmatprep.subr.bf16.mxu0 0
    %1647 = vmatpush2.bf16.msra.mxu0 0
    %1648 = vmatprep.subr.bf16.mxu0 0
    %1649 = vmatpush2.bf16.msra.mxu0 0
    %1650 = vmatprep.subr.bf16.mxu0 0
    %1651 = vmatpush2.bf16.msra.mxu0 0
    %1652 = vmatprep.subr.bf16.mxu0 0
    %1653 = vmatpush2.bf16.msra.mxu0 0
    %1654 = vmatprep.subr.bf16.mxu0 0
    %1655 = vmatpush2.bf16.msra.mxu0 0
    %1656 = vmatprep.subr.bf16.mxu0 0
    %1657 = vmatpush2.bf16.msra.mxu0 0
    %1658 = vmatprep.subr.bf16.mxu0 0
    %1659 = vmatpush2.bf16.msra.mxu0 0
    %1660 = vmatprep.subr.bf16.mxu0 0
    %1661 = vmatpush2.bf16.msra.mxu0 0
    %1662 = vmatprep.mubr.bf16.mxu0 0
    %1663 = vmatmul.mubr.bf16.gmra.mxu0 %v1628
    %v1664 = vpop.f32.mrf.mxu0
    %v1665 = vadd.f32 0.0, %v1664
    %v1666 = vpop.f32.mrf.mxu0
    %v1667 = vpop.f32.mrf.mxu0
    %v1668 = vpop.f32.mrf.mxu0
    %1669 = vdwg.mxu0
    %1671 = vrot.lane.b32.xlu0 %v1622, 64
    %v1672 = vpop.permute.xlu0 %1671
    %v1674 = vsel %vm170, %v1672, 0
    %1676 = vmatprep.subr.bf16.mxu0 0
    %1677 = vmatpush1.bf16.msra.mxu0 0
    %1678 = vmatprep.subr.bf16.mxu0 0
    %1679 = vmatpush1.bf16.msra.mxu0 0
    %1680 = vmatprep.subr.bf16.mxu0 0
    %1681 = vmatpush1.bf16.msra.mxu0 0
    %1682 = vmatprep.subr.bf16.mxu0 0
    %1683 = vmatpush1.bf16.msra.mxu0 0
    %1684 = vmatprep.subr.bf16.mxu0 0
    %1685 = vmatpush1.bf16.msra.mxu0 0
    %1686 = vmatprep.subr.bf16.mxu0 0
    %1687 = vmatpush1.bf16.msra.mxu0 0
    %1688 = vmatprep.subr.bf16.mxu0 0
    %1689 = vmatpush1.bf16.msra.mxu0 %v410
    %1690 = vmatprep.subr.bf16.mxu0 0
    %1691 = vmatpush1.bf16.msra.mxu0 %v409
    %1692 = vmatprep.subr.bf16.mxu0 0
    %1693 = vmatpush2.bf16.msra.mxu0 0
    %1694 = vmatprep.subr.bf16.mxu0 0
    %1695 = vmatpush2.bf16.msra.mxu0 0
    %1696 = vmatprep.subr.bf16.mxu0 0
    %1697 = vmatpush2.bf16.msra.mxu0 0
    %1698 = vmatprep.subr.bf16.mxu0 0
    %1699 = vmatpush2.bf16.msra.mxu0 0
    %1700 = vmatprep.subr.bf16.mxu0 0
    %1701 = vmatpush2.bf16.msra.mxu0 0
    %1702 = vmatprep.subr.bf16.mxu0 0
    %1703 = vmatpush2.bf16.msra.mxu0 0
    %1704 = vmatprep.subr.bf16.mxu0 0
    %1705 = vmatpush2.bf16.msra.mxu0 0
    %1706 = vmatprep.subr.bf16.mxu0 0
    %1707 = vmatpush2.bf16.msra.mxu0 0
    %1708 = vmatprep.mubr.bf16.mxu0 0
    %1709 = vmatmul.mubr.bf16.gmra.mxu0 %v1674
    %v1710 = vpop.f32.mrf.mxu0
    %v1711 = vadd.f32 %v1665, %v1710
    %v1712 = vpop.f32.mrf.mxu0
    %v1713 = vpop.f32.mrf.mxu0
    %v1714 = vpop.f32.mrf.mxu0
    %1715 = vdwg.mxu0
    %v1716 = vadd.f32 %v1711, %v265
    %v1717 = vmul.f32 %v1716, 0.5
    %v1718 = vtanh.pop %v1717
    %v1719 = vadd.f32 %v1718, 1.0
    %v1720 = vmul.f32 %v1719, 0.5
    %v1721 = vtanh.pop %v1716
    %v1722 = vmul.f32 %v1720, %v1552
    %1724 = vrot.lane.b32.xlu0 %v1721, 32
    %v1725 = vpop.permute.xlu0 %1724
    %v1727 = vmul.f32 %v1720, %v1725
    %1729 = vrot.lane.b32.xlu0 %v1727, 32
    %v1730 = vpop.permute.xlu0 %1729
    %v1732 = vadd.f32 %v1722, %v1730
    %v1733 = vtanh.pop %v1732
    %1735 = vrot.lane.b32.xlu0 %v1733, 32
    %v1736 = vpop.permute.xlu0 %1735
    %v1738 = vmul.f32 %v1720, %v1736
    %v1739 = vld [vmem:[#allocation11] sm:$0xf]
    %v1740 = vld [vmem:[#allocation11 + $0x4] sm:$0xf]
    %v1741 = vld [vmem:[#allocation11 + $0x8] sm:$0xf]
    %v1742 = vld [vmem:[#allocation11 + $0xc] sm:$0xf]
    %v1743 = vpack.c.bf16 %v1738, %v1738
    %v1744 = vld [vmem:[%s8] sm:$0x1]
    %v1746 = vlaneseq
    %v1747 = vshrl.u32 %v1746, 7
    %v1748 = vsub.s32 0, %v1747
    %v1749 = vrot.slane %v1744, %v1748
    %1752 = vrot.lane.b32.xlu0 %v1743, 64
    %v1753 = vpop.permute.xlu0 %1752
    %v1758 = vunpack.c.l.b16 %v1739
    %v1759 = vunpack.c.l.b16 %v1740
    %v1760 = vunpack.c.l.b16 %v1741
    %v1761 = vunpack.c.l.b16 %v1742
    %v1762 = vpack.c.b16 %v1759, %v1758
    %v1763 = vpack.c.b16 %v1761, %v1760
    %v1767 = vsel %vm170, %v1753, 0
    %1769 = vmatprep.subr.bf16.mxu0 0
    %1770 = vmatpush1.bf16.msra.mxu0 0
    %1771 = vmatprep.subr.bf16.mxu0 0
    %1772 = vmatpush1.bf16.msra.mxu0 0
    %1773 = vmatprep.subr.bf16.mxu0 0
    %1774 = vmatpush1.bf16.msra.mxu0 0
    %1775 = vmatprep.subr.bf16.mxu0 0
    %1776 = vmatpush1.bf16.msra.mxu0 0
    %1777 = vmatprep.subr.bf16.mxu0 0
    %1778 = vmatpush1.bf16.msra.mxu0 0
    %1779 = vmatprep.subr.bf16.mxu0 0
    %1780 = vmatpush1.bf16.msra.mxu0 0
    %1781 = vmatprep.subr.bf16.mxu0 0
    %1782 = vmatpush1.bf16.msra.mxu0 %v1763
    %1783 = vmatprep.subr.bf16.mxu0 0
    %1784 = vmatpush1.bf16.msra.mxu0 %v1762
    %1785 = vmatprep.subr.bf16.mxu0 0
    %1786 = vmatpush2.bf16.msra.mxu0 0
    %1787 = vmatprep.subr.bf16.mxu0 0
    %1788 = vmatpush2.bf16.msra.mxu0 0
    %1789 = vmatprep.subr.bf16.mxu0 0
    %1790 = vmatpush2.bf16.msra.mxu0 0
    %1791 = vmatprep.subr.bf16.mxu0 0
    %1792 = vmatpush2.bf16.msra.mxu0 0
    %1793 = vmatprep.subr.bf16.mxu0 0
    %1794 = vmatpush2.bf16.msra.mxu0 0
    %1795 = vmatprep.subr.bf16.mxu0 0
    %1796 = vmatpush2.bf16.msra.mxu0 0
    %1797 = vmatprep.subr.bf16.mxu0 0
    %1798 = vmatpush2.bf16.msra.mxu0 0
    %1799 = vmatprep.subr.bf16.mxu0 0
    %1800 = vmatpush2.bf16.msra.mxu0 0
    %1801 = vmatprep.mubr.bf16.mxu0 0
    %1802 = vmatmul.mubr.bf16.gmra.mxu0 %v1767
    %v1803 = vpop.f32.mrf.mxu0
    %v1804 = vadd.f32 %v1749, %v1803
    %v1805 = vpop.f32.mrf.mxu0
    %v1806 = vpop.f32.mrf.mxu0
    %v1807 = vpop.f32.mrf.mxu0
    %1808 = vdwg.mxu0
    %v1809 = vmax.f32 %v1804, 0.0
    %v1810 = vld [vmem:[#allocation13] sm:$0xf]
    %v1811 = vld [vmem:[#allocation13 + $0x4] sm:$0xf]
    %v1812 = vld [vmem:[#allocation13 + $0x8] sm:$0xf]
    %v1813 = vld [vmem:[#allocation13 + $0xc] sm:$0xf]
    %v1814 = vld [vmem:[#allocation13 + $0x10] sm:$0xf]
    %v1815 = vld [vmem:[#allocation13 + $0x14] sm:$0xf]
    %v1816 = vld [vmem:[#allocation13 + $0x18] sm:$0xf]
    %v1817 = vld [vmem:[#allocation13 + $0x1c] sm:$0xf]
    %v1818 = vpack.c.bf16 %v1809, %v1809
    %v1819 = vld [vmem:[%s10] sm:$0x1]
    %v1821 = vlaneseq
    %v1822 = vshrl.u32 %v1821, 7
    %v1823 = vsub.s32 0, %v1822
    %v1824 = vrot.slane %v1819, %v1823
    %v1834 = vunpack.c.l.b16 %v1810
    %v1835 = vunpack.c.l.b16 %v1811
    %v1836 = vunpack.c.l.b16 %v1812
    %v1837 = vunpack.c.l.b16 %v1813
    %v1838 = vunpack.c.l.b16 %v1814
    %v1839 = vunpack.c.l.b16 %v1815
    %v1840 = vunpack.c.l.b16 %v1816
    %v1841 = vunpack.c.l.b16 %v1817
    %v1842 = vpack.c.b16 %v1835, %v1834
    %v1843 = vpack.c.b16 %v1837, %v1836
    %v1844 = vpack.c.b16 %v1839, %v1838
    %v1845 = vpack.c.b16 %v1841, %v1840
    %vm1850 = vcmask 523264
    %v1852 = vsel %vm1850, %v1818, 0
    %1854 = vmatprep.subr.bf16.mxu0 0
    %1855 = vmatpush1.bf16.msra.mxu0 0
    %1856 = vmatprep.subr.bf16.mxu0 0
    %1857 = vmatpush1.bf16.msra.mxu0 0
    %1858 = vmatprep.subr.bf16.mxu0 0
    %1859 = vmatpush1.bf16.msra.mxu0 0
    %1860 = vmatprep.subr.bf16.mxu0 0
    %1861 = vmatpush1.bf16.msra.mxu0 0
    %1862 = vmatprep.subr.bf16.mxu0 0
    %1863 = vmatpush1.bf16.msra.mxu0 %v1845
    %1864 = vmatprep.subr.bf16.mxu0 0
    %1865 = vmatpush1.bf16.msra.mxu0 %v1844
    %1866 = vmatprep.subr.bf16.mxu0 0
    %1867 = vmatpush1.bf16.msra.mxu0 %v1843
    %1868 = vmatprep.subr.bf16.mxu0 0
    %1869 = vmatpush1.bf16.msra.mxu0 %v1842
    %1870 = vmatprep.subr.bf16.mxu0 0
    %1871 = vmatpush2.bf16.msra.mxu0 0
    %1872 = vmatprep.subr.bf16.mxu0 0
    %1873 = vmatpush2.bf16.msra.mxu0 0
    %1874 = vmatprep.subr.bf16.mxu0 0
    %1875 = vmatpush2.bf16.msra.mxu0 0
    %1876 = vmatprep.subr.bf16.mxu0 0
    %1877 = vmatpush2.bf16.msra.mxu0 0
    %1878 = vmatprep.subr.bf16.mxu0 0
    %1879 = vmatpush2.bf16.msra.mxu0 0
    %1880 = vmatprep.subr.bf16.mxu0 0
    %1881 = vmatpush2.bf16.msra.mxu0 0
    %1882 = vmatprep.subr.bf16.mxu0 0
    %1883 = vmatpush2.bf16.msra.mxu0 0
    %1884 = vmatprep.subr.bf16.mxu0 0
    %1885 = vmatpush2.bf16.msra.mxu0 0
    %1886 = vmatprep.mubr.bf16.mxu0 0
    %1887 = vmatmul.mubr.bf16.gmra.mxu0 %v1852
    %v1888 = vpop.f32.mrf.mxu0
    %v1889 = vadd.f32 %v1824, %v1888
    %v1890 = vpop.f32.mrf.mxu0
    %v1891 = vpop.f32.mrf.mxu0
    %v1892 = vpop.f32.mrf.mxu0
    %1893 = vdwg.mxu0
    %1894 = vst [vmem:[#allocation14] sm:$0xff] %v1889
    // Predicated region
    $region74: #{tpu_custom_call.1} parent=1 // pred_check
      _
    $region75: #{tpu_custom_call.1} parent=1 // pred_check_branch
      %1896 = sbr.rel (0) target = $region77
    $region76: #{tpu_custom_call.1} parent=1 // pred_region
      %s1898 = ssub.s32 128, 128
      %1899 = vsyncadd [#allocation4], %s1898
      %s1901 = sshll.u32 [#allocation14], 4
      %s1902 = int_to_ptr.vmem [resolvable:$true] %s1901
      %1904 = dma.vmem_to_hbm [thread:$0]  %s1902, 128, %s11, [#allocation4]
    $region77: #{tpu_custom_call.1} parent=1 // pred_fallthru
      _
    // Predicated region
    $region78: #{tpu_custom_call.1} parent=1 // pred_check
      _
    $region79: #{tpu_custom_call.1} parent=1 // pred_check_branch
      %1906 = sbr.rel (0) target = $region81
    $region80: #{tpu_custom_call.1} parent=1 // pred_region
      %1907 = dma.done [#allocation4], 128
    $region81: #{tpu_custom_call.1} parent=1 // pred_fallthru
      _
    %1908 = vsyncpa [#allocation3], 1
    %1909 = vsyncpa [#allocation6], 1
    %1910 = vsyncpa [#allocation9], 1
    %1911 = vsyncpa [#allocation12], 1
    %1912 = vsyncpa [#allocation4], 1

</llo_original>
